<compile_context>
chip_gen: v6e
topology: v6e:2x2x1
jax: 0.10.0
libtpu: 0.0.40
codegen_flags: <defaults>
</compile_context>

<pallas_src>
import math

import jax
import jax.numpy as jnp
from jax.experimental import pallas as pl
from jax.experimental.pallas import tpu as pltpu


def _rope3d_kernel(x_ref, y_ref, z_ref, p_ref, out_ref):
    # x_ref/y_ref/z_ref: (1, tile_n, 1) f32 coordinate columns.
    # p_ref:             (4, 2F) f32 rows = [freq_x_mask, freq_y_mask, freq_z_mask, phase].
    # out_ref:           (1, tile_n, 2F) f32, interleaved (cos, sin) lane pairs.
    fx = p_ref[0:1, :]          # (1, 2F)
    fy = p_ref[1:2, :]
    fz = p_ref[2:3, :]
    ph = p_ref[3:4, :]
    # Per-row scalar (lane broadcast) * per-lane frequency, + pi/2 phase on cos
    # lanes so a single sin yields both cos and sin lanes: cos(t) = sin(t + pi/2).
    ang = x_ref[0] * fx + y_ref[0] * fy + z_ref[0] * fz + ph   # (tile_n, 2F)
    out_ref[0] = jnp.sin(ang)


def _pick_tile_n(n, max_rows=1024):
    """Largest multiple-of-8 divisor of n that is <= max_rows (or n itself if small)."""
    if n <= max_rows:
        return n
    cand = max_rows - (max_rows % 8)
    while cand >= 8:
        if n % cand == 0:
            return cand
        cand -= 8
    return n


def rotary_position_encoding_3d(xyz, feature_dim, tile_n=None):
    """Pallas equivalent of RotaryPositionEncoding3D(feature_dim).forward(xyz)."""
    B, N, C = xyz.shape
    assert C == 3
    F = feature_dim
    assert F % 6 == 0, "feature_dim must be divisible by 6 for Rotary3D"
    Fa = F // 3                 # per-axis feature width
    L = 2 * F                   # fused lane width (interleaved cos/sin)

    if tile_n is None:
        tile_n = _pick_tile_n(N)
    assert tile_n == N or (tile_n % 8 == 0 and N % tile_n == 0), (
        "tile_n must divide N and be a multiple of 8 (or equal N)")

    xyz = xyz.astype(jnp.float32)
    x = xyz[:, :, 0:1]
    y = xyz[:, :, 1:2]
    z = xyz[:, :, 2:3]

    # --- tiny per-lane tables (built once, plain JAX) -------------------------
    # Output lane l = 2*d + c, feature d = l//2, channel c (0=cos, 1=sin),
    # axis a = d // Fa, frequency = base[(d % Fa) // 2].
    base = jnp.exp(
        jnp.arange(0, Fa, 2, dtype=jnp.float32) * (-math.log(10000.0) / Fa))
    wdup = jnp.repeat(base, 2)                       # (Fa,)  each freq twice
    feat_freq = jnp.tile(wdup, 3)                    # (F,)   x/y/z share freqs
    lane_freq = jnp.repeat(feat_freq, 2)             # (2F,)  cos/sin share freq
    lane_axis = jnp.repeat(jnp.arange(3, dtype=jnp.int32), 2 * Fa)   # (2F,)
    zero = jnp.zeros((L,), jnp.float32)
    fx = jnp.where(lane_axis == 0, lane_freq, zero)
    fy = jnp.where(lane_axis == 1, lane_freq, zero)
    fz = jnp.where(lane_axis == 2, lane_freq, zero)
    phase = jnp.where((jnp.arange(L) % 2) == 0,
                      jnp.float32(math.pi / 2.0), jnp.float32(0.0))
    params = jnp.stack([fx, fy, fz, phase], axis=0)  # (4, 2F)

    fused = pl.pallas_call(
        _rope3d_kernel,
        out_shape=jax.ShapeDtypeStruct((B, N, L), jnp.float32),
        grid_spec=pltpu.PrefetchScalarGridSpec(
            num_scalar_prefetch=0,
            grid=(B, N // tile_n),
            in_specs=[
                pl.BlockSpec((1, tile_n, 1), lambda b, n: (b, n, 0)),
                pl.BlockSpec((1, tile_n, 1), lambda b, n: (b, n, 0)),
                pl.BlockSpec((1, tile_n, 1), lambda b, n: (b, n, 0)),
                pl.BlockSpec((4, L), lambda b, n: (0, 0)),
            ],
            out_specs=pl.BlockSpec((1, tile_n, L), lambda b, n: (b, n, 0)),
        ),
        compiler_params=pltpu.CompilerParams(
            dimension_semantics=("parallel", "parallel"),
            vmem_limit_bytes=32 * 1024 * 1024,
        ),
    )(x, y, z, params)

    # Free row-major reshape: (B, N, 2F) -> (B, N, F, 2) with
    # [..., d, 0] = cos and [..., d, 1] = sin.
    return fused.reshape(B, N, F, 2)


def _reference_3d(xyz, feature_dim):
    """Pure-JAX mirror of the PyTorch RotaryPositionEncoding3D.forward."""
    B, N, _ = xyz.shape
    Fa = feature_dim // 3
    div = jnp.exp(
        jnp.arange(0, Fa, 2, dtype=jnp.float32) * (-math.log(10000.0) / Fa)
    ).reshape(1, 1, -1)
    x, y, z = xyz[..., 0:1], xyz[..., 1:2], xyz[..., 2:3]

    def dup(f):
        return jnp.stack([f, f], axis=-1).reshape(B, N, -1)

    sinx, cosx = dup(jnp.sin(x * div)), dup(jnp.cos(x * div))
    siny, cosy = dup(jnp.sin(y * div)), dup(jnp.cos(y * div))
    sinz, cosz = dup(jnp.sin(z * div)), dup(jnp.cos(z * div))
    cosp = jnp.concatenate([cosx, cosy, cosz], axis=-1)
    sinp = jnp.concatenate([sinx, siny, sinz], axis=-1)
    return jnp.stack([cosp, sinp], axis=-1)


if __name__ == "__main__":
    B, N, F = 2, 64, 192
    key = jax.random.PRNGKey(0)
    # XYZ: (B, N, 3) point coordinates (e.g. normalized workspace coords).
    xyz = jax.random.uniform(key, (B, N, 3), dtype=jnp.float32,
                             minval=-2.0, maxval=2.0)

    out = rotary_position_encoding_3d(xyz, feature_dim=F, tile_n=32)
    out = jax.block_until_ready(out)

    ref = _reference_3d(xyz, F)
    assert out.shape == (B, N, F, 2), out.shape
    max_err = float(jnp.max(jnp.abs(out - ref)))
    assert jnp.allclose(out, ref, atol=1e-5, rtol=1e-5), (
        f"mismatch vs reference, max err={max_err}")

    print("KERNEL_OK")
</pallas_src>

<mosaic_0001>
module attributes {stable_mosaic.version = 11 : i64} {
  func.func @_rope3d_kernel(%arg0: i32, %arg1: i32, %arg2: memref<1x32x1xf32, #tpu.memory_space<vmem>>, %arg3: memref<1x32x1xf32, #tpu.memory_space<vmem>>, %arg4: memref<1x32x1xf32, #tpu.memory_space<vmem>>, %arg5: memref<4x384xf32, #tpu.memory_space<vmem>>, %arg6: memref<1x32x384xf32, #tpu.memory_space<vmem>>) attributes {dimension_semantics = [#tpu.dimension_semantics<parallel>, #tpu.dimension_semantics<parallel>], iteration_bounds = array<i64: 2, 2>, scalar_prefetch = 0 : i64, scratch_operands = 0 : i64, tpu.core_type = #tpu.core_type<tc>, window_params = [{transform_indices = @transform_0, window_bounds = array<i64: 1, 32, 1>}, {transform_indices = @transform_1, window_bounds = array<i64: 1, 32, 1>}, {transform_indices = @transform_2, window_bounds = array<i64: 1, 32, 1>}, {pipeline_mode = #tpu.pipeline_mode<synchronous>, transform_indices = @transform_3, window_bounds = array<i64: 4, 384>}, {transform_indices = @transform_4, window_bounds = array<i64: 1, 32, 384>}]} {
    %c0 = arith.constant 0 : index
    %c0_0 = arith.constant 0 : index
    %0 = vector.load %arg5[%c0, %c0_0] : memref<4x384xf32, #tpu.memory_space<vmem>>, vector<1x384xf32>
    %c1 = arith.constant 1 : index
    %c0_1 = arith.constant 0 : index
    %1 = vector.load %arg5[%c1, %c0_1] : memref<4x384xf32, #tpu.memory_space<vmem>>, vector<1x384xf32>
    %c2 = arith.constant 2 : index
    %c0_2 = arith.constant 0 : index
    %2 = vector.load %arg5[%c2, %c0_2] : memref<4x384xf32, #tpu.memory_space<vmem>>, vector<1x384xf32>
    %c3 = arith.constant 3 : index
    %c0_3 = arith.constant 0 : index
    %3 = vector.load %arg5[%c3, %c0_3] : memref<4x384xf32, #tpu.memory_space<vmem>>, vector<1x384xf32>
    %c0_4 = arith.constant 0 : index
    %c0_5 = arith.constant 0 : index
    %c0_6 = arith.constant 0 : index
    %4 = vector.load %arg2[%c0_4, %c0_5, %c0_6] : memref<1x32x1xf32, #tpu.memory_space<vmem>>, vector<1x32x1xf32>
    %5 = vector.shape_cast %4 : vector<1x32x1xf32> to vector<32x1xf32>
    %6 = vector.broadcast %5 : vector<32x1xf32> to vector<32x384xf32>
    %7 = vector.broadcast %0 : vector<1x384xf32> to vector<32x384xf32>
    %8 = arith.mulf %6, %7 : vector<32x384xf32>
    %c0_7 = arith.constant 0 : index
    %c0_8 = arith.constant 0 : index
    %c0_9 = arith.constant 0 : index
    %9 = vector.load %arg3[%c0_7, %c0_8, %c0_9] : memref<1x32x1xf32, #tpu.memory_space<vmem>>, vector<1x32x1xf32>
    %10 = vector.shape_cast %9 : vector<1x32x1xf32> to vector<32x1xf32>
    %11 = vector.broadcast %10 : vector<32x1xf32> to vector<32x384xf32>
    %12 = vector.broadcast %1 : vector<1x384xf32> to vector<32x384xf32>
    %13 = arith.mulf %11, %12 : vector<32x384xf32>
    %14 = arith.addf %8, %13 : vector<32x384xf32>
    %c0_10 = arith.constant 0 : index
    %c0_11 = arith.constant 0 : index
    %c0_12 = arith.constant 0 : index
    %15 = vector.load %arg4[%c0_10, %c0_11, %c0_12] : memref<1x32x1xf32, #tpu.memory_space<vmem>>, vector<1x32x1xf32>
    %16 = vector.shape_cast %15 : vector<1x32x1xf32> to vector<32x1xf32>
    %17 = vector.broadcast %16 : vector<32x1xf32> to vector<32x384xf32>
    %18 = vector.broadcast %2 : vector<1x384xf32> to vector<32x384xf32>
    %19 = arith.mulf %17, %18 : vector<32x384xf32>
    %20 = arith.addf %14, %19 : vector<32x384xf32>
    %21 = vector.broadcast %3 : vector<1x384xf32> to vector<32x384xf32>
    %22 = arith.addf %20, %21 : vector<32x384xf32>
    %23 = math.sin %22 : vector<32x384xf32>
    %c0_13 = arith.constant 0 : index
    %c0_14 = arith.constant 0 : index
    %c0_15 = arith.constant 0 : index
    %24 = vector.load %arg6[%c0_13, %c0_14, %c0_15] : memref<1x32x384xf32, #tpu.memory_space<vmem>>, vector<1x32x384xf32>
    %25 = vector.shape_cast %24 : vector<1x32x384xf32> to vector<32x384xf32>
    %26 = vector.shape_cast %23 : vector<32x384xf32> to vector<1x32x384xf32>
    tpu.vector_store %arg6[%c0_13, %c0_14, %c0_15], %26 {strides = array<i32>} : memref<1x32x384xf32, #tpu.memory_space<vmem>>, vector<1x32x384xf32>,
    return
  }
  func.func @transform_0(%arg0: i32, %arg1: i32) -> (i32, i32, i32) {
    %c0_i32 = arith.constant 0 : i32
    %c0_i32_0 = arith.constant 0 : i32
    return %arg0, %arg1, %c0_i32 : i32, i32, i32
  }
  func.func @transform_1(%arg0: i32, %arg1: i32) -> (i32, i32, i32) {
    %c0_i32 = arith.constant 0 : i32
    %c0_i32_0 = arith.constant 0 : i32
    return %arg0, %arg1, %c0_i32 : i32, i32, i32
  }
  func.func @transform_2(%arg0: i32, %arg1: i32) -> (i32, i32, i32) {
    %c0_i32 = arith.constant 0 : i32
    %c0_i32_0 = arith.constant 0 : i32
    return %arg0, %arg1, %c0_i32 : i32, i32, i32
  }
  func.func @transform_3(%arg0: i32, %arg1: i32) -> (i32, i32) {
    %c0_i32 = arith.constant 0 : i32
    %c0_i32_0 = arith.constant 0 : i32
    %c0_i32_1 = arith.constant 0 : i32
    return %c0_i32, %c0_i32_0 : i32, i32
  }
  func.func @transform_4(%arg0: i32, %arg1: i32) -> (i32, i32, i32) {
    %c0_i32 = arith.constant 0 : i32
    %c0_i32_0 = arith.constant 0 : i32
    return %arg0, %arg1, %c0_i32 : i32, i32, i32
  }
}

</mosaic_0001>

<llo_original>
// kernel: tpu_custom_call.1
$region0: #{tpu_custom_call.1}
  #allocation0 [shape = 'u32[]', space=smem, size = 0x4, offset = 0x4, fixed_abs, tag = 'smem constant byte address 0x4 - core index']
  #allocation1 [shape = 'u32[144,128]{1,0:T(1,128)}', space=vmem, size = 0x12000, scoped, tag = 'internal scratch']
  %s0 = inlined_call_operand.vmem [shape: f32[2,64,1], index: 0, kind: input, shape index: {}]
  %s1 = inlined_call_operand.vmem [shape: f32[2,64,1], index: 1, kind: input, shape index: {}]
  %s2 = inlined_call_operand.vmem [shape: f32[2,64,1], index: 2, kind: input, shape index: {}]
  %s3 = inlined_call_operand.vmem [shape: f32[4,384], index: 3, kind: input, shape index: {}]
  %s4 = inlined_call_operand.hbm [shape: f32[2,64,384], index: 4, kind: output, shape index: {}]
  %s5 = sld [smem:[#allocation0]]
  $region49: #{tpu_custom_call.1} parent=0
    _
  %s7 = ssub.s32 1, %s5
  %s8 = scalar_select 0, %s7, %s5
  $region1: #{tpu_custom_call.1} parent=0
    #allocation2 [shape = 'u8[98304]{0}', space=vmem, size = 0x18000, scoped, tag = 'output window, operand 0']
    #allocation3 [shape = 's32[2]{0}', space=sflag, size = 0x8, scoped, tag = 'scoped memory for tpu_custom_call.1']
    %9 = vsyncpa [#allocation3], 0
    %s10 = scalar_lea.sflag [#allocation3], 1
    %11 = vsyncpa %s10, 0
    loop: start=0, step=1, limit=6
    $region2: #{tpu_custom_call.1} parent=1 // loop_pre_header
      _
    $region3: #{tpu_custom_call.1} parent=1 // loop_header
      %s13 = sphi 0, %s17
      %p14 = scmp.ge.s32.totalorder %s13, 6
      %s20 = sphi 0, %s32
      %s21 = sphi 0, %s28
      %s22 = sphi 0, %s20
      %s23 = sphi 0, %s21
      %s24 = sphi 0, %s22
      %s25 = sphi 0, %s23
      %s37 = sphi 0, %s39
      %s40 = sphi 0, %s37
      %s41 = sphi 0, %s40
      %s57 = sphi 0, %s41
      %s65 = sphi 0, %s67
      %s68 = sphi 0, %s65
      %s69 = sphi 0, %s68
      %s85 = sphi 0, %s69
      %s93 = sphi 0, %s95
      %s96 = sphi 0, %s93
      %s97 = sphi 0, %s96
      %s113 = sphi 0, %s97
      %s117 = sphi 0, %s117
      %s119 = sphi 0, %s117
      %s120 = sphi 0, %s119
      %s134 = sphi 0, %s120
      %s142 = sphi 0, %s144
      %s145 = sphi 0, %s142
      %s146 = sphi 0, %s145
      %s162 = sphi 0, %s146
    $region4: #{tpu_custom_call.1} parent=1 // loop_header_branch
      %16 = sbr.rel (%p14) target = $region8
    $region5: #{tpu_custom_call.1} parent=1 // loop_body
      %s18 = ssub.s32 %s13, 1
      %s19 = ssub.s32 %s13, 2
      %s26 = sadd.s32 1, %s21
      %p27 = scmp.ge.s32.totalorder %s26, 2
      %s28 = scalar_select %p27, 0, %s26
      %s29 = sadd.s32 1, %s20
      %s30 = scalar_select %p27, %s29, %s20
      %p31 = scmp.ge.s32.totalorder %s30, 2
      %s32 = scalar_select %p31, 0, %s30
      %s33 = ssub.s32 %s20, %s32
      %s34 = ssub.s32 %s21, %s28
      %s35 = sor.u32 %s33, %s34
      %p36 = scmp.eq.s32.totalorder %s35, 0
      %s38 = sadd.s32 %s37, 1
      %s39 = scalar_select %p36, %s37, %s38
      %p42 = pneg %p36
      %p43 = scmp.eq.s32.totalorder %s13, 3
      %p44 = por %p42, %p43
      %p45 = scmp.ne.s32.totalorder %s37, %s40
      %p46 = scmp.eq.s32.totalorder %s13, 0
      %p47 = por %p45, %p46
      %p48 = scmp.ne.s32.totalorder %s37, %s40
      %p49 = scmp.eq.s32.totalorder %s18, 3
      %p50 = por %p48, %p49
      %p51 = scmp.ne.s32.totalorder %s40, %s41
      %p52 = scmp.eq.s32.totalorder %s18, 0
      %p53 = por %p51, %p52
      %p54 = scmp.ne.s32.totalorder %s40, %s41
      %p55 = scmp.eq.s32.totalorder %s19, 3
      %p56 = por %p54, %p55
      %p58 = scmp.ne.s32.totalorder %s41, %s57
      %p59 = scmp.eq.s32.totalorder %s19, 0
      %p60 = por %p58, %p59
      %s61 = ssub.s32 %s20, %s32
      %s62 = ssub.s32 %s21, %s28
      %s63 = sor.u32 %s61, %s62
      %p64 = scmp.eq.s32.totalorder %s63, 0
      %s66 = sadd.s32 %s65, 1
      %s67 = scalar_select %p64, %s65, %s66
      %p70 = pneg %p64
      %p71 = scmp.eq.s32.totalorder %s13, 3
      %p72 = por %p70, %p71
      %p73 = scmp.ne.s32.totalorder %s65, %s68
      %p74 = scmp.eq.s32.totalorder %s13, 0
      %p75 = por %p73, %p74
      %p76 = scmp.ne.s32.totalorder %s65, %s68
      %p77 = scmp.eq.s32.totalorder %s18, 3
      %p78 = por %p76, %p77
      %p79 = scmp.ne.s32.totalorder %s68, %s69
      %p80 = scmp.eq.s32.totalorder %s18, 0
      %p81 = por %p79, %p80
      %p82 = scmp.ne.s32.totalorder %s68, %s69
      %p83 = scmp.eq.s32.totalorder %s19, 3
      %p84 = por %p82, %p83
      %p86 = scmp.ne.s32.totalorder %s69, %s85
      %p87 = scmp.eq.s32.totalorder %s19, 0
      %p88 = por %p86, %p87
      %s89 = ssub.s32 %s20, %s32
      %s90 = ssub.s32 %s21, %s28
      %s91 = sor.u32 %s89, %s90
      %p92 = scmp.eq.s32.totalorder %s91, 0
      %s94 = sadd.s32 %s93, 1
      %s95 = scalar_select %p92, %s93, %s94
      %p98 = pneg %p92
      %p99 = scmp.eq.s32.totalorder %s13, 3
      %p100 = por %p98, %p99
      %p101 = scmp.ne.s32.totalorder %s93, %s96
      %p102 = scmp.eq.s32.totalorder %s13, 0
      %p103 = por %p101, %p102
      %p104 = scmp.ne.s32.totalorder %s93, %s96
      %p105 = scmp.eq.s32.totalorder %s18, 3
      %p106 = por %p104, %p105
      %p107 = scmp.ne.s32.totalorder %s96, %s97
      %p108 = scmp.eq.s32.totalorder %s18, 0
      %p109 = por %p107, %p108
      %p110 = scmp.ne.s32.totalorder %s96, %s97
      %p111 = scmp.eq.s32.totalorder %s19, 3
      %p112 = por %p110, %p111
      %p114 = scmp.ne.s32.totalorder %s97, %s113
      %p115 = scmp.eq.s32.totalorder %s19, 0
      %p116 = por %p114, %p115
      %s118 = sadd.s32 %s117, 1
      %p121 = scmp.eq.s32.totalorder %s13, 3
      %p122 = scmp.ne.s32.totalorder %s117, %s119
      %p123 = scmp.eq.s32.totalorder %s13, 0
      %p124 = por %p122, %p123
      %p125 = scmp.ne.s32.totalorder %s117, %s119
      %p126 = scmp.eq.s32.totalorder %s18, 3
      %p127 = por %p125, %p126
      %p128 = scmp.ne.s32.totalorder %s119, %s120
      %p129 = scmp.eq.s32.totalorder %s18, 0
      %p130 = por %p128, %p129
      %p131 = scmp.ne.s32.totalorder %s119, %s120
      %p132 = scmp.eq.s32.totalorder %s19, 3
      %p133 = por %p131, %p132
      %p135 = scmp.ne.s32.totalorder %s120, %s134
      %p136 = scmp.eq.s32.totalorder %s19, 0
      %p137 = por %p135, %p136
      %s138 = ssub.s32 %s20, %s32
      %s139 = ssub.s32 %s21, %s28
      %s140 = sor.u32 %s138, %s139
      %p141 = scmp.eq.s32.totalorder %s140, 0
      %s143 = sadd.s32 %s142, 1
      %s144 = scalar_select %p141, %s142, %s143
      %p147 = pneg %p141
      %p148 = scmp.eq.s32.totalorder %s13, 3
      %p149 = por %p147, %p148
      %p150 = scmp.ne.s32.totalorder %s142, %s145
      %p151 = scmp.eq.s32.totalorder %s13, 0
      %p152 = por %p150, %p151
      %p153 = scmp.ne.s32.totalorder %s142, %s145
      %p154 = scmp.eq.s32.totalorder %s18, 3
      %p155 = por %p153, %p154
      %p156 = scmp.ne.s32.totalorder %s145, %s146
      %p157 = scmp.eq.s32.totalorder %s18, 0
      %p158 = por %p156, %p157
      %p159 = scmp.ne.s32.totalorder %s145, %s146
      %p160 = scmp.eq.s32.totalorder %s19, 3
      %p161 = por %p159, %p160
      %p163 = scmp.ne.s32.totalorder %s146, %s162
      %p164 = scmp.eq.s32.totalorder %s19, 0
      %p165 = por %p163, %p164
      %p166 = scmp.le.s32.totalorder 1, %s13
      %p167 = scmp.lt.s32.totalorder %s13, 5
      %p168 = pnand %p166, %p167
      %p169 = pneg %p168
      // Predicated region
      $region9: #{tpu_custom_call.1} parent=5 // pred_check
        _
      $region10: #{tpu_custom_call.1} parent=5 // pred_check_branch
        %171 = sbr.rel (%p168) target = $region12
      $region11: #{tpu_custom_call.1} parent=5 // pred_region
        %s172 = ssub.s32 %s13, 1
        // Predicated region
        $region13: #{tpu_custom_call.1} parent=11 // pred_check
          %p173 = pneg %p130
        $region14: #{tpu_custom_call.1} parent=11 // pred_check_branch
          %175 = sbr.rel (%p173) target = $region16
        $region15: #{tpu_custom_call.1} parent=11 // pred_region
          _
        $region16: #{tpu_custom_call.1} parent=11 // pred_fallthru
          _
      $region12: #{tpu_custom_call.1} parent=5 // pred_fallthru
        _
      %p176 = scmp.lt.s32.totalorder %s13, 4
      // Predicated region
      $region17: #{tpu_custom_call.1} parent=5 // pred_check
        %p177 = pneg %p176
      $region18: #{tpu_custom_call.1} parent=5 // pred_check_branch
        %179 = sbr.rel (%p177) target = $region20
      $region19: #{tpu_custom_call.1} parent=5 // pred_region
        // Predicated region
        $region21: #{tpu_custom_call.1} parent=19 // pred_check
          %p180 = pneg %p47
        $region22: #{tpu_custom_call.1} parent=19 // pred_check_branch
          %182 = sbr.rel (%p180) target = $region24
        $region23: #{tpu_custom_call.1} parent=19 // pred_region
          %s183 = smul.u32 4, %s21
          %p184 = scmp.lt.s32.totalorder %s20, 1
          %s185 = scalar_select %p184, %s20, 1
          %p186 = scmp.lt.s32.totalorder %s183, 7
          %s187 = scalar_select %p186, %s183, 7
          %s188 = smul.addr %s185, 8
          %s189 = sadd.s32 %s187, %s188
          %s190 = smul.addr %s189, 8
          %s191 = scalar_lea.vmem %s0, %s190
          %s192 = smul.u32 4, %s21
        $region24: #{tpu_custom_call.1} parent=19 // pred_fallthru
          _
        // Predicated region
        $region25: #{tpu_custom_call.1} parent=19 // pred_check
          %p193 = pneg %p75
        $region26: #{tpu_custom_call.1} parent=19 // pred_check_branch
          %195 = sbr.rel (%p193) target = $region28
        $region27: #{tpu_custom_call.1} parent=19 // pred_region
          %s196 = smul.u32 4, %s21
          %p197 = scmp.lt.s32.totalorder %s20, 1
          %s198 = scalar_select %p197, %s20, 1
          %p199 = scmp.lt.s32.totalorder %s196, 7
          %s200 = scalar_select %p199, %s196, 7
          %s201 = smul.addr %s198, 8
          %s202 = sadd.s32 %s200, %s201
          %s203 = smul.addr %s202, 8
          %s204 = scalar_lea.vmem %s1, %s203
          %s205 = smul.u32 4, %s21
        $region28: #{tpu_custom_call.1} parent=19 // pred_fallthru
          _
        // Predicated region
        $region29: #{tpu_custom_call.1} parent=19 // pred_check
          %p206 = pneg %p103
        $region30: #{tpu_custom_call.1} parent=19 // pred_check_branch
          %208 = sbr.rel (%p206) target = $region32
        $region31: #{tpu_custom_call.1} parent=19 // pred_region
          %s209 = smul.u32 4, %s21
          %p210 = scmp.lt.s32.totalorder %s20, 1
          %s211 = scalar_select %p210, %s20, 1
          %p212 = scmp.lt.s32.totalorder %s209, 7
          %s213 = scalar_select %p212, %s209, 7
          %s214 = smul.addr %s211, 8
          %s215 = sadd.s32 %s213, %s214
          %s216 = smul.addr %s215, 8
          %s217 = scalar_lea.vmem %s2, %s216
          %s218 = smul.u32 4, %s21
        $region32: #{tpu_custom_call.1} parent=19 // pred_fallthru
          _
      $region20: #{tpu_custom_call.1} parent=5 // pred_fallthru
        _
      %p219 = scmp.le.s32.totalorder 1, %s13
      %p220 = scmp.lt.s32.totalorder %s13, 5
      %p221 = pnand %p219, %p220
      %p222 = pneg %p221
      // Predicated region
      $region33: #{tpu_custom_call.1} parent=5 // pred_check
        _
      $region34: #{tpu_custom_call.1} parent=5 // pred_check_branch
        %224 = sbr.rel (%p221) target = $region36
      $region35: #{tpu_custom_call.1} parent=5 // pred_region
        %s225 = ssub.s32 %s13, 1
        %s226 = smul.u32 4, %s23
        %p227 = scmp.lt.s32.totalorder %s22, 1
        %s228 = scalar_select %p227, %s22, 1
        %p229 = scmp.lt.s32.totalorder %s226, 7
        %s230 = scalar_select %p229, %s226, 7
        %s231 = smul.addr %s228, 8
        %s232 = sadd.s32 %s230, %s231
        %s233 = smul.addr %s232, 8
        %s234 = scalar_lea.vmem %s0, %s233
        %p235 = pneg %p53
        %p236 = pneg %p50
        %s237 = smul.u32 4, %s23
        %p238 = scmp.lt.s32.totalorder %s22, 1
        %s239 = scalar_select %p238, %s22, 1
        %p240 = scmp.lt.s32.totalorder %s237, 7
        %s241 = scalar_select %p240, %s237, 7
        %s242 = smul.addr %s239, 8
        %s243 = sadd.s32 %s241, %s242
        %s244 = smul.addr %s243, 8
        %s245 = scalar_lea.vmem %s1, %s244
        %p246 = pneg %p81
        %p247 = pneg %p78
        %s248 = smul.u32 4, %s23
        %p249 = scmp.lt.s32.totalorder %s22, 1
        %s250 = scalar_select %p249, %s22, 1
        %p251 = scmp.lt.s32.totalorder %s248, 7
        %s252 = scalar_select %p251, %s248, 7
        %s253 = smul.addr %s250, 8
        %s254 = sadd.s32 %s252, %s253
        %s255 = smul.addr %s254, 8
        %s256 = scalar_lea.vmem %s2, %s255
        %p257 = pneg %p109
        %p258 = pneg %p106
        %p259 = pneg %p130
        %p260 = pneg %p127
        %p261 = pneg %p158
        %p262 = pneg %p155
        %s263 = sand.u32 %s145, 1
        %s264 = scalar_lea.sflag [#allocation3], %s263
        %s265 = sand.u32 %s145, 1
        %s266 = smul.addr %s265, 96
        %s267 = scalar_lea.vmem [#allocation2], %s266
        %s268 = smul.u32 4, %s23
        %p269 = scmp.lt.s32.totalorder %s22, 1
        %s270 = scalar_select %p269, %s22, 1
        %p271 = scmp.lt.s32.totalorder %s268, 7
        %s272 = scalar_select %p271, %s268, 7
        %s273 = smul.addr %s270, 8
        %s274 = sadd.s32 %s272, %s273
        %s275 = smul.addr %s274, 8
        %s276 = scalar_lea.vmem %s0, %s275
        %s277 = smul.u32 4, %s23
        %s278 = smul.u32 4, %s23
        %p279 = scmp.lt.s32.totalorder %s22, 1
        %s280 = scalar_select %p279, %s22, 1
        %p281 = scmp.lt.s32.totalorder %s278, 7
        %s282 = scalar_select %p281, %s278, 7
        %s283 = smul.addr %s280, 8
        %s284 = sadd.s32 %s282, %s283
        %s285 = smul.addr %s284, 8
        %s286 = scalar_lea.vmem %s1, %s285
        %s287 = smul.u32 4, %s23
        %s288 = smul.u32 4, %s23
        %p289 = scmp.lt.s32.totalorder %s22, 1
        %s290 = scalar_select %p289, %s22, 1
        %p291 = scmp.lt.s32.totalorder %s288, 7
        %s292 = scalar_select %p291, %s288, 7
        %s293 = smul.addr %s290, 8
        %s294 = sadd.s32 %s292, %s293
        %s295 = smul.addr %s294, 8
        %s296 = scalar_lea.vmem %s2, %s295
        %s297 = smul.u32 4, %s23
        %s298 = smul.u32 4, %s23
        %v299 = vld [vmem:[%s3] ss:$4 sm:$0x7]
        %s300 = scalar_lea.vmem %s3, 1
        %v301 = vld [vmem:[%s300] ss:$4 sm:$0x7]
        %s302 = scalar_lea.vmem %s3, 2
        %v303 = vld [vmem:[%s302] ss:$4 sm:$0x7]
        %s304 = scalar_lea.vmem %s3, 3
        %v305 = vld [vmem:[%s304] ss:$4 sm:$0x7]
        %v306 = vld [vmem:[%s276] sm:$0xff]
        %v307 = vld [vmem:[%s276 + $0x8] sm:$0xff]
        %v308 = vld [vmem:[%s276 + $0x10] sm:$0xff]
        %v309 = vld [vmem:[%s276 + $0x18] sm:$0xff]
        %311 = vset.pattern.permute.xlu0 0
        %312 = vperm.xlu0 %311, %v306
        %v313 = vpop.permute.xlu0 %312
        %316 = vset.pattern.permute.xlu0 0
        %317 = vperm.xlu0 %316, %v307
        %v318 = vpop.permute.xlu0 %317
        %321 = vset.pattern.permute.xlu0 0
        %322 = vperm.xlu0 %321, %v308
        %v323 = vpop.permute.xlu0 %322
        %326 = vset.pattern.permute.xlu0 0
        %327 = vperm.xlu0 %326, %v309
        %v328 = vpop.permute.xlu0 %327
        %v331 = vlaneseq
        %v332 = vshrl.u32 %v331, 7
        %v333 = vsub.s32 0, %v332
        %v334 = vrot.slane %v299, %v333
        %v335 = vlaneseq
        %v336 = vshrl.u32 %v335, 7
        %v337 = vsub.s32 1, %v336
        %v338 = vrot.slane %v299, %v337
        %v339 = vlaneseq
        %v340 = vshrl.u32 %v339, 7
        %v341 = vsub.s32 2, %v340
        %v342 = vrot.slane %v299, %v341
        %v346 = vmul.f32 %v313, %v334
        %v347 = vmul.f32 %v313, %v338
        %v348 = vmul.f32 %v313, %v342
        %v349 = vmul.f32 %v318, %v334
        %v350 = vmul.f32 %v318, %v338
        %v351 = vmul.f32 %v318, %v342
        %v352 = vmul.f32 %v323, %v334
        %v353 = vmul.f32 %v323, %v338
        %v354 = vmul.f32 %v323, %v342
        %v355 = vmul.f32 %v328, %v334
        %v356 = vmul.f32 %v328, %v338
        %v357 = vmul.f32 %v328, %v342
        %v358 = vld [vmem:[%s286] sm:$0xff]
        %v359 = vld [vmem:[%s286 + $0x8] sm:$0xff]
        %v360 = vld [vmem:[%s286 + $0x10] sm:$0xff]
        %v361 = vld [vmem:[%s286 + $0x18] sm:$0xff]
        %363 = vset.pattern.permute.xlu0 0
        %364 = vperm.xlu0 %363, %v358
        %v365 = vpop.permute.xlu0 %364
        %368 = vset.pattern.permute.xlu0 0
        %369 = vperm.xlu0 %368, %v359
        %v370 = vpop.permute.xlu0 %369
        %373 = vset.pattern.permute.xlu0 0
        %374 = vperm.xlu0 %373, %v360
        %v375 = vpop.permute.xlu0 %374
        %378 = vset.pattern.permute.xlu0 0
        %379 = vperm.xlu0 %378, %v361
        %v380 = vpop.permute.xlu0 %379
        %v383 = vlaneseq
        %v384 = vshrl.u32 %v383, 7
        %v385 = vsub.s32 0, %v384
        %v386 = vrot.slane %v301, %v385
        %v387 = vlaneseq
        %v388 = vshrl.u32 %v387, 7
        %v389 = vsub.s32 1, %v388
        %v390 = vrot.slane %v301, %v389
        %v391 = vlaneseq
        %v392 = vshrl.u32 %v391, 7
        %v393 = vsub.s32 2, %v392
        %v394 = vrot.slane %v301, %v393
        %v398 = vmul.f32 %v365, %v386
        %v399 = vmul.f32 %v365, %v390
        %v400 = vmul.f32 %v365, %v394
        %v401 = vmul.f32 %v370, %v386
        %v402 = vmul.f32 %v370, %v390
        %v403 = vmul.f32 %v370, %v394
        %v404 = vmul.f32 %v375, %v386
        %v405 = vmul.f32 %v375, %v390
        %v406 = vmul.f32 %v375, %v394
        %v407 = vmul.f32 %v380, %v386
        %v408 = vmul.f32 %v380, %v390
        %v409 = vmul.f32 %v380, %v394
        %v410 = vadd.f32 %v346, %v398
        %v411 = vadd.f32 %v347, %v399
        %v412 = vadd.f32 %v348, %v400
        %v413 = vadd.f32 %v349, %v401
        %v414 = vadd.f32 %v350, %v402
        %v415 = vadd.f32 %v351, %v403
        %v416 = vadd.f32 %v352, %v404
        %v417 = vadd.f32 %v353, %v405
        %v418 = vadd.f32 %v354, %v406
        %v419 = vadd.f32 %v355, %v407
        %v420 = vadd.f32 %v356, %v408
        %v421 = vadd.f32 %v357, %v409
        %v422 = vld [vmem:[%s296] sm:$0xff]
        %v423 = vld [vmem:[%s296 + $0x8] sm:$0xff]
        %v424 = vld [vmem:[%s296 + $0x10] sm:$0xff]
        %v425 = vld [vmem:[%s296 + $0x18] sm:$0xff]
        %427 = vset.pattern.permute.xlu0 0
        %428 = vperm.xlu0 %427, %v422
        %v429 = vpop.permute.xlu0 %428
        %432 = vset.pattern.permute.xlu0 0
        %433 = vperm.xlu0 %432, %v423
        %v434 = vpop.permute.xlu0 %433
        %437 = vset.pattern.permute.xlu0 0
        %438 = vperm.xlu0 %437, %v424
        %v439 = vpop.permute.xlu0 %438
        %442 = vset.pattern.permute.xlu0 0
        %443 = vperm.xlu0 %442, %v425
        %v444 = vpop.permute.xlu0 %443
        %v447 = vlaneseq
        %v448 = vshrl.u32 %v447, 7
        %v449 = vsub.s32 0, %v448
        %v450 = vrot.slane %v303, %v449
        %v451 = vlaneseq
        %v452 = vshrl.u32 %v451, 7
        %v453 = vsub.s32 1, %v452
        %v454 = vrot.slane %v303, %v453
        %v455 = vlaneseq
        %v456 = vshrl.u32 %v455, 7
        %v457 = vsub.s32 2, %v456
        %v458 = vrot.slane %v303, %v457
        %v462 = vmul.f32 %v429, %v450
        %v463 = vmul.f32 %v429, %v454
        %v464 = vmul.f32 %v429, %v458
        %v465 = vmul.f32 %v434, %v450
        %v466 = vmul.f32 %v434, %v454
        %v467 = vmul.f32 %v434, %v458
        %v468 = vmul.f32 %v439, %v450
        %v469 = vmul.f32 %v439, %v454
        %v470 = vmul.f32 %v439, %v458
        %v471 = vmul.f32 %v444, %v450
        %v472 = vmul.f32 %v444, %v454
        %v473 = vmul.f32 %v444, %v458
        %v474 = vadd.f32 %v410, %v462
        %v475 = vadd.f32 %v411, %v463
        %v476 = vadd.f32 %v412, %v464
        %v477 = vadd.f32 %v413, %v465
        %v478 = vadd.f32 %v414, %v466
        %v479 = vadd.f32 %v415, %v467
        %v480 = vadd.f32 %v416, %v468
        %v481 = vadd.f32 %v417, %v469
        %v482 = vadd.f32 %v418, %v470
        %v483 = vadd.f32 %v419, %v471
        %v484 = vadd.f32 %v420, %v472
        %v485 = vadd.f32 %v421, %v473
        %v487 = vlaneseq
        %v488 = vshrl.u32 %v487, 7
        %v489 = vsub.s32 0, %v488
        %v490 = vrot.slane %v305, %v489
        %v491 = vlaneseq
        %v492 = vshrl.u32 %v491, 7
        %v493 = vsub.s32 1, %v492
        %v494 = vrot.slane %v305, %v493
        %v495 = vlaneseq
        %v496 = vshrl.u32 %v495, 7
        %v497 = vsub.s32 2, %v496
        %v498 = vrot.slane %v305, %v497
        %v502 = vadd.f32 %v474, %v490
        %v503 = vadd.f32 %v475, %v494
        %v504 = vadd.f32 %v476, %v498
        %v505 = vadd.f32 %v477, %v490
        %v506 = vadd.f32 %v478, %v494
        %v507 = vadd.f32 %v479, %v498
        %v508 = vadd.f32 %v480, %v490
        %v509 = vadd.f32 %v481, %v494
        %v510 = vadd.f32 %v482, %v498
        %v511 = vadd.f32 %v483, %v490
        %v512 = vadd.f32 %v484, %v494
        %v513 = vadd.f32 %v485, %v498
        %v514 = vand.u32 2147483647, %v502
        %vm515 = vcmp.le.f32.partialorder %v514, 0.7853982
        %vm516 = vcmp.lt.s32.totalorder %v502, 0
        %v517 = vand.u32 %v502, 2139095040
        %v518 = vshrl.u32 %v517, 23
        %v519 = vsub.s32 %v518, 127
        %v520 = vand.u32 2147483647, %v502
        %v521 = vand.u32 %v520, 8388607
        %v522 = vor.u32 %v521, 8388608
        %v523 = vsub.s32 0, %v522
        %v524 = vadd.s32 %v519, 1
        %vm525 = vcmp.gt.s32.totalorder %v524, 0
        %v526 = vsel %vm525, %v524, 0
        %v527 = vshrl.u32 %v526, 5
        %v528 = vand.u32 %v526, 31
        %v529 = vsub.s32 32, %v528
        %v530 = vshrl.u32 683565275, %v529
        %v531 = vshll.u32 683565275, %v528
        %v532 = vshrl.u32 2475754826, %v529
        %v533 = vor.u32 %v531, %v532
        %v534 = vshll.u32 2475754826, %v528
        %v535 = vshrl.u32 2131351028, %v529
        %v536 = vor.u32 %v534, %v535
        %v537 = vshll.u32 2131351028, %v528
        %v538 = vshrl.u32 2102212464, %v529
        %v539 = vor.u32 %v537, %v538
        %v540 = vshll.u32 2102212464, %v528
        %v541 = vshrl.u32 920167782, %v529
        %v542 = vor.u32 %v540, %v541
        %v543 = vshll.u32 920167782, %v528
        %v544 = vshrl.u32 1326507024, %v529
        %v545 = vor.u32 %v543, %v544
        %vm546 = vcmp.lt.s32.totalorder %v527, 1
        %vm547 = vcmp.lt.s32.totalorder %v527, 2
        %vm548 = vcmp.lt.s32.totalorder %v527, 3
        %vm549 = vcmp.lt.s32.totalorder %v527, 4
        %v550 = vsel %vm546, %v530, %v533
        %v551 = vsel %vm549, %v539, 2102212464
        %v552 = vsel %vm548, %v536, %v551
        %v553 = vsel %vm547, %v550, %v552
        %v554 = vsel %vm546, %v533, %v536
        %v555 = vsel %vm549, %v542, 920167782
        %v556 = vsel %vm548, %v539, %v555
        %v557 = vsel %vm547, %v554, %v556
        %v558 = vsel %vm546, %v536, %v539
        %v559 = vsel %vm549, %v545, 1326507024
        %v560 = vsel %vm548, %v542, %v559
        %v561 = vsel %vm547, %v558, %v560
        %v562 = vshll.u32 %v522, 8
        %v563 = vmul.u32.u64.compose %v562, %v561
        %v564 = vextract.low.u32 %v563
        %v565 = vextract.high.u32 %v563
        %v566 = vmul.u32.u64.compose %v562, %v557
        %v567 = vextract.low.u32 %v566
        %v568 = vextract.high.u32 %v566
        %v569 = vmul.u32 %v562, %v553
        %v570 = vadd.s32 %v565, %v567
        %vm571 = vc.u32 %v565, %v567
        %v572 = vadd.s32 %v568, 1
        %v573 = vsel %vm571, %v572, %v568
        %v574 = vadd.s32 %v569, %v573
        %v575 = vadd.s32 %v574, 536870912
        %v576 = vshrl.u32 %v575, 30
        %v577 = vshll.u32 %v576, 30
        %v578 = vsub.s32 %v574, %v577
        %vm579 = vcmp.lt.s32.totalorder %v578, 0
        %v580 = vsub.s32 0, %v578
        %v581 = vsel %vm579, %v580, %v578
        %v582 = vclz %v581
        %v583 = vsub.s32 %v582, 2
        %vm584 = vcmp.gt.s32.totalorder 0, %v583
        %v585 = vsel %vm584, 0, %v583
        %v586 = vsub.s32 32, %v585
        %v587 = vshll.u32 %v578, %v585
        %v588 = vshrl.u32 %v570, %v586
        %v589 = vor.u32 %v587, %v588
        %v590 = vsub.s32 4294967266, %v585
        %v591 = vadd.s32 %v590, 127
        %v592 = vshll.u32 %v591, 23
        %v593 = vor.u32 4788187, %v592
        %v594 = vand.u32 2147483647, %v593
        %v596 = vcvt.s32.f32 %v589
        %v597 = vmul.f32 %v596, %v594
        %v598 = vxor.u32 %v597, 2147483648
        %v599 = vsel %vm516, %v598, %v597
        %v600 = vsub.s32 4, %v576
        %v601 = vsel %vm516, %v600, %v576
        %v602 = vsel %vm515, %v502, %v599
        %v603 = vsel %vm515, 0, %v601
        %v604 = vcosq.f32.pop %v602
        %v605 = vsinq.f32.pop %v602
        %vm606 = vweird.f32 %v502
        %v607 = vadd.s32 %v603, 3
        %v608 = vand.u32 %v607, 3
        %vm609 = vcmp.lt.s32.totalorder %v608, 2
        %vm610 = vcmp.eq.s32.totalorder %v608, 0
        %v611 = vxor.u32 %v605, 2147483648
        %v612 = vsel %vm610, %v604, %v611
        %vm613 = vcmp.eq.s32.totalorder %v608, 2
        %v614 = vxor.u32 %v604, 2147483648
        %v615 = vsel %vm613, %v614, %v605
        %v616 = vsel %vm609, %v612, %v615
        %v617 = vsel %vm606, nan, %v616
        %v618 = vand.u32 2147483647, %v503
        %vm619 = vcmp.le.f32.partialorder %v618, 0.7853982
        %vm620 = vcmp.lt.s32.totalorder %v503, 0
        %v621 = vand.u32 %v503, 2139095040
        %v622 = vshrl.u32 %v621, 23
        %v623 = vsub.s32 %v622, 127
        %v624 = vand.u32 2147483647, %v503
        %v625 = vand.u32 %v624, 8388607
        %v626 = vor.u32 %v625, 8388608
        %v627 = vsub.s32 0, %v626
        %v628 = vadd.s32 %v623, 1
        %vm629 = vcmp.gt.s32.totalorder %v628, 0
        %v630 = vsel %vm629, %v628, 0
        %v631 = vshrl.u32 %v630, 5
        %v632 = vand.u32 %v630, 31
        %v633 = vsub.s32 32, %v632
        %v634 = vshrl.u32 683565275, %v633
        %v635 = vshll.u32 683565275, %v632
        %v636 = vshrl.u32 2475754826, %v633
        %v637 = vor.u32 %v635, %v636
        %v638 = vshll.u32 2475754826, %v632
        %v639 = vshrl.u32 2131351028, %v633
        %v640 = vor.u32 %v638, %v639
        %v641 = vshll.u32 2131351028, %v632
        %v642 = vshrl.u32 2102212464, %v633
        %v643 = vor.u32 %v641, %v642
        %v644 = vshll.u32 2102212464, %v632
        %v645 = vshrl.u32 920167782, %v633
        %v646 = vor.u32 %v644, %v645
        %v647 = vshll.u32 920167782, %v632
        %v648 = vshrl.u32 1326507024, %v633
        %v649 = vor.u32 %v647, %v648
        %vm650 = vcmp.lt.s32.totalorder %v631, 1
        %vm651 = vcmp.lt.s32.totalorder %v631, 2
        %vm652 = vcmp.lt.s32.totalorder %v631, 3
        %vm653 = vcmp.lt.s32.totalorder %v631, 4
        %v654 = vsel %vm650, %v634, %v637
        %v655 = vsel %vm653, %v643, 2102212464
        %v656 = vsel %vm652, %v640, %v655
        %v657 = vsel %vm651, %v654, %v656
        %v658 = vsel %vm650, %v637, %v640
        %v659 = vsel %vm653, %v646, 920167782
        %v660 = vsel %vm652, %v643, %v659
        %v661 = vsel %vm651, %v658, %v660
        %v662 = vsel %vm650, %v640, %v643
        %v663 = vsel %vm653, %v649, 1326507024
        %v664 = vsel %vm652, %v646, %v663
        %v665 = vsel %vm651, %v662, %v664
        %v666 = vshll.u32 %v626, 8
        %v667 = vmul.u32.u64.compose %v666, %v665
        %v668 = vextract.low.u32 %v667
        %v669 = vextract.high.u32 %v667
        %v670 = vmul.u32.u64.compose %v666, %v661
        %v671 = vextract.low.u32 %v670
        %v672 = vextract.high.u32 %v670
        %v673 = vmul.u32 %v666, %v657
        %v674 = vadd.s32 %v669, %v671
        %vm675 = vc.u32 %v669, %v671
        %v676 = vadd.s32 %v672, 1
        %v677 = vsel %vm675, %v676, %v672
        %v678 = vadd.s32 %v673, %v677
        %v679 = vadd.s32 %v678, 536870912
        %v680 = vshrl.u32 %v679, 30
        %v681 = vshll.u32 %v680, 30
        %v682 = vsub.s32 %v678, %v681
        %vm683 = vcmp.lt.s32.totalorder %v682, 0
        %v684 = vsub.s32 0, %v682
        %v685 = vsel %vm683, %v684, %v682
        %v686 = vclz %v685
        %v687 = vsub.s32 %v686, 2
        %vm688 = vcmp.gt.s32.totalorder 0, %v687
        %v689 = vsel %vm688, 0, %v687
        %v690 = vsub.s32 32, %v689
        %v691 = vshll.u32 %v682, %v689
        %v692 = vshrl.u32 %v674, %v690
        %v693 = vor.u32 %v691, %v692
        %v694 = vsub.s32 4294967266, %v689
        %v695 = vadd.s32 %v694, 127
        %v696 = vshll.u32 %v695, 23
        %v697 = vor.u32 4788187, %v696
        %v698 = vand.u32 2147483647, %v697
        %v700 = vcvt.s32.f32 %v693
        %v701 = vmul.f32 %v700, %v698
        %v702 = vxor.u32 %v701, 2147483648
        %v703 = vsel %vm620, %v702, %v701
        %v704 = vsub.s32 4, %v680
        %v705 = vsel %vm620, %v704, %v680
        %v706 = vsel %vm619, %v503, %v703
        %v707 = vsel %vm619, 0, %v705
        %v708 = vcosq.f32.pop %v706
        %v709 = vsinq.f32.pop %v706
        %vm710 = vweird.f32 %v503
        %v711 = vadd.s32 %v707, 3
        %v712 = vand.u32 %v711, 3
        %vm713 = vcmp.lt.s32.totalorder %v712, 2
        %vm714 = vcmp.eq.s32.totalorder %v712, 0
        %v715 = vxor.u32 %v709, 2147483648
        %v716 = vsel %vm714, %v708, %v715
        %vm717 = vcmp.eq.s32.totalorder %v712, 2
        %v718 = vxor.u32 %v708, 2147483648
        %v719 = vsel %vm717, %v718, %v709
        %v720 = vsel %vm713, %v716, %v719
        %v721 = vsel %vm710, nan, %v720
        %v722 = vand.u32 2147483647, %v504
        %vm723 = vcmp.le.f32.partialorder %v722, 0.7853982
        %vm724 = vcmp.lt.s32.totalorder %v504, 0
        %v725 = vand.u32 %v504, 2139095040
        %v726 = vshrl.u32 %v725, 23
        %v727 = vsub.s32 %v726, 127
        %v728 = vand.u32 2147483647, %v504
        %v729 = vand.u32 %v728, 8388607
        %v730 = vor.u32 %v729, 8388608
        %v731 = vsub.s32 0, %v730
        %v732 = vadd.s32 %v727, 1
        %vm733 = vcmp.gt.s32.totalorder %v732, 0
        %v734 = vsel %vm733, %v732, 0
        %v735 = vshrl.u32 %v734, 5
        %v736 = vand.u32 %v734, 31
        %v737 = vsub.s32 32, %v736
        %v738 = vshrl.u32 683565275, %v737
        %v739 = vshll.u32 683565275, %v736
        %v740 = vshrl.u32 2475754826, %v737
        %v741 = vor.u32 %v739, %v740
        %v742 = vshll.u32 2475754826, %v736
        %v743 = vshrl.u32 2131351028, %v737
        %v744 = vor.u32 %v742, %v743
        %v745 = vshll.u32 2131351028, %v736
        %v746 = vshrl.u32 2102212464, %v737
        %v747 = vor.u32 %v745, %v746
        %v748 = vshll.u32 2102212464, %v736
        %v749 = vshrl.u32 920167782, %v737
        %v750 = vor.u32 %v748, %v749
        %v751 = vshll.u32 920167782, %v736
        %v752 = vshrl.u32 1326507024, %v737
        %v753 = vor.u32 %v751, %v752
        %vm754 = vcmp.lt.s32.totalorder %v735, 1
        %vm755 = vcmp.lt.s32.totalorder %v735, 2
        %vm756 = vcmp.lt.s32.totalorder %v735, 3
        %vm757 = vcmp.lt.s32.totalorder %v735, 4
        %v758 = vsel %vm754, %v738, %v741
        %v759 = vsel %vm757, %v747, 2102212464
        %v760 = vsel %vm756, %v744, %v759
        %v761 = vsel %vm755, %v758, %v760
        %v762 = vsel %vm754, %v741, %v744
        %v763 = vsel %vm757, %v750, 920167782
        %v764 = vsel %vm756, %v747, %v763
        %v765 = vsel %vm755, %v762, %v764
        %v766 = vsel %vm754, %v744, %v747
        %v767 = vsel %vm757, %v753, 1326507024
        %v768 = vsel %vm756, %v750, %v767
        %v769 = vsel %vm755, %v766, %v768
        %v770 = vshll.u32 %v730, 8
        %v771 = vmul.u32.u64.compose %v770, %v769
        %v772 = vextract.low.u32 %v771
        %v773 = vextract.high.u32 %v771
        %v774 = vmul.u32.u64.compose %v770, %v765
        %v775 = vextract.low.u32 %v774
        %v776 = vextract.high.u32 %v774
        %v777 = vmul.u32 %v770, %v761
        %v778 = vadd.s32 %v773, %v775
        %vm779 = vc.u32 %v773, %v775
        %v780 = vadd.s32 %v776, 1
        %v781 = vsel %vm779, %v780, %v776
        %v782 = vadd.s32 %v777, %v781
        %v783 = vadd.s32 %v782, 536870912
        %v784 = vshrl.u32 %v783, 30
        %v785 = vshll.u32 %v784, 30
        %v786 = vsub.s32 %v782, %v785
        %vm787 = vcmp.lt.s32.totalorder %v786, 0
        %v788 = vsub.s32 0, %v786
        %v789 = vsel %vm787, %v788, %v786
        %v790 = vclz %v789
        %v791 = vsub.s32 %v790, 2
        %vm792 = vcmp.gt.s32.totalorder 0, %v791
        %v793 = vsel %vm792, 0, %v791
        %v794 = vsub.s32 32, %v793
        %v795 = vshll.u32 %v786, %v793
        %v796 = vshrl.u32 %v778, %v794
        %v797 = vor.u32 %v795, %v796
        %v798 = vsub.s32 4294967266, %v793
        %v799 = vadd.s32 %v798, 127
        %v800 = vshll.u32 %v799, 23
        %v801 = vor.u32 4788187, %v800
        %v802 = vand.u32 2147483647, %v801
        %v804 = vcvt.s32.f32 %v797
        %v805 = vmul.f32 %v804, %v802
        %v806 = vxor.u32 %v805, 2147483648
        %v807 = vsel %vm724, %v806, %v805
        %v808 = vsub.s32 4, %v784
        %v809 = vsel %vm724, %v808, %v784
        %v810 = vsel %vm723, %v504, %v807
        %v811 = vsel %vm723, 0, %v809
        %v812 = vcosq.f32.pop %v810
        %v813 = vsinq.f32.pop %v810
        %vm814 = vweird.f32 %v504
        %v815 = vadd.s32 %v811, 3
        %v816 = vand.u32 %v815, 3
        %vm817 = vcmp.lt.s32.totalorder %v816, 2
        %vm818 = vcmp.eq.s32.totalorder %v816, 0
        %v819 = vxor.u32 %v813, 2147483648
        %v820 = vsel %vm818, %v812, %v819
        %vm821 = vcmp.eq.s32.totalorder %v816, 2
        %v822 = vxor.u32 %v812, 2147483648
        %v823 = vsel %vm821, %v822, %v813
        %v824 = vsel %vm817, %v820, %v823
        %v825 = vsel %vm814, nan, %v824
        %v826 = vand.u32 2147483647, %v505
        %vm827 = vcmp.le.f32.partialorder %v826, 0.7853982
        %vm828 = vcmp.lt.s32.totalorder %v505, 0
        %v829 = vand.u32 %v505, 2139095040
        %v830 = vshrl.u32 %v829, 23
        %v831 = vsub.s32 %v830, 127
        %v832 = vand.u32 2147483647, %v505
        %v833 = vand.u32 %v832, 8388607
        %v834 = vor.u32 %v833, 8388608
        %v835 = vsub.s32 0, %v834
        %v836 = vadd.s32 %v831, 1
        %vm837 = vcmp.gt.s32.totalorder %v836, 0
        %v838 = vsel %vm837, %v836, 0
        %v839 = vshrl.u32 %v838, 5
        %v840 = vand.u32 %v838, 31
        %v841 = vsub.s32 32, %v840
        %v842 = vshrl.u32 683565275, %v841
        %v843 = vshll.u32 683565275, %v840
        %v844 = vshrl.u32 2475754826, %v841
        %v845 = vor.u32 %v843, %v844
        %v846 = vshll.u32 2475754826, %v840
        %v847 = vshrl.u32 2131351028, %v841
        %v848 = vor.u32 %v846, %v847
        %v849 = vshll.u32 2131351028, %v840
        %v850 = vshrl.u32 2102212464, %v841
        %v851 = vor.u32 %v849, %v850
        %v852 = vshll.u32 2102212464, %v840
        %v853 = vshrl.u32 920167782, %v841
        %v854 = vor.u32 %v852, %v853
        %v855 = vshll.u32 920167782, %v840
        %v856 = vshrl.u32 1326507024, %v841
        %v857 = vor.u32 %v855, %v856
        %vm858 = vcmp.lt.s32.totalorder %v839, 1
        %vm859 = vcmp.lt.s32.totalorder %v839, 2
        %vm860 = vcmp.lt.s32.totalorder %v839, 3
        %vm861 = vcmp.lt.s32.totalorder %v839, 4
        %v862 = vsel %vm858, %v842, %v845
        %v863 = vsel %vm861, %v851, 2102212464
        %v864 = vsel %vm860, %v848, %v863
        %v865 = vsel %vm859, %v862, %v864
        %v866 = vsel %vm858, %v845, %v848
        %v867 = vsel %vm861, %v854, 920167782
        %v868 = vsel %vm860, %v851, %v867
        %v869 = vsel %vm859, %v866, %v868
        %v870 = vsel %vm858, %v848, %v851
        %v871 = vsel %vm861, %v857, 1326507024
        %v872 = vsel %vm860, %v854, %v871
        %v873 = vsel %vm859, %v870, %v872
        %v874 = vshll.u32 %v834, 8
        %v875 = vmul.u32.u64.compose %v874, %v873
        %v876 = vextract.low.u32 %v875
        %v877 = vextract.high.u32 %v875
        %v878 = vmul.u32.u64.compose %v874, %v869
        %v879 = vextract.low.u32 %v878
        %v880 = vextract.high.u32 %v878
        %v881 = vmul.u32 %v874, %v865
        %v882 = vadd.s32 %v877, %v879
        %vm883 = vc.u32 %v877, %v879
        %v884 = vadd.s32 %v880, 1
        %v885 = vsel %vm883, %v884, %v880
        %v886 = vadd.s32 %v881, %v885
        %v887 = vadd.s32 %v886, 536870912
        %v888 = vshrl.u32 %v887, 30
        %v889 = vshll.u32 %v888, 30
        %v890 = vsub.s32 %v886, %v889
        %vm891 = vcmp.lt.s32.totalorder %v890, 0
        %v892 = vsub.s32 0, %v890
        %v893 = vsel %vm891, %v892, %v890
        %v894 = vclz %v893
        %v895 = vsub.s32 %v894, 2
        %vm896 = vcmp.gt.s32.totalorder 0, %v895
        %v897 = vsel %vm896, 0, %v895
        %v898 = vsub.s32 32, %v897
        %v899 = vshll.u32 %v890, %v897
        %v900 = vshrl.u32 %v882, %v898
        %v901 = vor.u32 %v899, %v900
        %v902 = vsub.s32 4294967266, %v897
        %v903 = vadd.s32 %v902, 127
        %v904 = vshll.u32 %v903, 23
        %v905 = vor.u32 4788187, %v904
        %v906 = vand.u32 2147483647, %v905
        %v908 = vcvt.s32.f32 %v901
        %v909 = vmul.f32 %v908, %v906
        %v910 = vxor.u32 %v909, 2147483648
        %v911 = vsel %vm828, %v910, %v909
        %v912 = vsub.s32 4, %v888
        %v913 = vsel %vm828, %v912, %v888
        %v914 = vsel %vm827, %v505, %v911
        %v915 = vsel %vm827, 0, %v913
        %v916 = vcosq.f32.pop %v914
        %v917 = vsinq.f32.pop %v914
        %vm918 = vweird.f32 %v505
        %v919 = vadd.s32 %v915, 3
        %v920 = vand.u32 %v919, 3
        %vm921 = vcmp.lt.s32.totalorder %v920, 2
        %vm922 = vcmp.eq.s32.totalorder %v920, 0
        %v923 = vxor.u32 %v917, 2147483648
        %v924 = vsel %vm922, %v916, %v923
        %vm925 = vcmp.eq.s32.totalorder %v920, 2
        %v926 = vxor.u32 %v916, 2147483648
        %v927 = vsel %vm925, %v926, %v917
        %v928 = vsel %vm921, %v924, %v927
        %v929 = vsel %vm918, nan, %v928
        %v930 = vand.u32 2147483647, %v506
        %vm931 = vcmp.le.f32.partialorder %v930, 0.7853982
        %vm932 = vcmp.lt.s32.totalorder %v506, 0
        %v933 = vand.u32 %v506, 2139095040
        %v934 = vshrl.u32 %v933, 23
        %v935 = vsub.s32 %v934, 127
        %v936 = vand.u32 2147483647, %v506
        %v937 = vand.u32 %v936, 8388607
        %v938 = vor.u32 %v937, 8388608
        %v939 = vsub.s32 0, %v938
        %v940 = vadd.s32 %v935, 1
        %vm941 = vcmp.gt.s32.totalorder %v940, 0
        %v942 = vsel %vm941, %v940, 0
        %v943 = vshrl.u32 %v942, 5
        %v944 = vand.u32 %v942, 31
        %v945 = vsub.s32 32, %v944
        %v946 = vshrl.u32 683565275, %v945
        %v947 = vshll.u32 683565275, %v944
        %v948 = vshrl.u32 2475754826, %v945
        %v949 = vor.u32 %v947, %v948
        %v950 = vshll.u32 2475754826, %v944
        %v951 = vshrl.u32 2131351028, %v945
        %v952 = vor.u32 %v950, %v951
        %v953 = vshll.u32 2131351028, %v944
        %v954 = vshrl.u32 2102212464, %v945
        %v955 = vor.u32 %v953, %v954
        %v956 = vshll.u32 2102212464, %v944
        %v957 = vshrl.u32 920167782, %v945
        %v958 = vor.u32 %v956, %v957
        %v959 = vshll.u32 920167782, %v944
        %v960 = vshrl.u32 1326507024, %v945
        %v961 = vor.u32 %v959, %v960
        %vm962 = vcmp.lt.s32.totalorder %v943, 1
        %vm963 = vcmp.lt.s32.totalorder %v943, 2
        %vm964 = vcmp.lt.s32.totalorder %v943, 3
        %vm965 = vcmp.lt.s32.totalorder %v943, 4
        %v966 = vsel %vm962, %v946, %v949
        %v967 = vsel %vm965, %v955, 2102212464
        %v968 = vsel %vm964, %v952, %v967
        %v969 = vsel %vm963, %v966, %v968
        %v970 = vsel %vm962, %v949, %v952
        %v971 = vsel %vm965, %v958, 920167782
        %v972 = vsel %vm964, %v955, %v971
        %v973 = vsel %vm963, %v970, %v972
        %v974 = vsel %vm962, %v952, %v955
        %v975 = vsel %vm965, %v961, 1326507024
        %v976 = vsel %vm964, %v958, %v975
        %v977 = vsel %vm963, %v974, %v976
        %v978 = vshll.u32 %v938, 8
        %v979 = vmul.u32.u64.compose %v978, %v977
        %v980 = vextract.low.u32 %v979
        %v981 = vextract.high.u32 %v979
        %v982 = vmul.u32.u64.compose %v978, %v973
        %v983 = vextract.low.u32 %v982
        %v984 = vextract.high.u32 %v982
        %v985 = vmul.u32 %v978, %v969
        %v986 = vadd.s32 %v981, %v983
        %vm987 = vc.u32 %v981, %v983
        %v988 = vadd.s32 %v984, 1
        %v989 = vsel %vm987, %v988, %v984
        %v990 = vadd.s32 %v985, %v989
        %v991 = vadd.s32 %v990, 536870912
        %v992 = vshrl.u32 %v991, 30
        %v993 = vshll.u32 %v992, 30
        %v994 = vsub.s32 %v990, %v993
        %vm995 = vcmp.lt.s32.totalorder %v994, 0
        %v996 = vsub.s32 0, %v994
        %v997 = vsel %vm995, %v996, %v994
        %v998 = vclz %v997
        %v999 = vsub.s32 %v998, 2
        %vm1000 = vcmp.gt.s32.totalorder 0, %v999
        %v1001 = vsel %vm1000, 0, %v999
        %v1002 = vsub.s32 32, %v1001
        %v1003 = vshll.u32 %v994, %v1001
        %v1004 = vshrl.u32 %v986, %v1002
        %v1005 = vor.u32 %v1003, %v1004
        %v1006 = vsub.s32 4294967266, %v1001
        %v1007 = vadd.s32 %v1006, 127
        %v1008 = vshll.u32 %v1007, 23
        %v1009 = vor.u32 4788187, %v1008
        %v1010 = vand.u32 2147483647, %v1009
        %v1012 = vcvt.s32.f32 %v1005
        %v1013 = vmul.f32 %v1012, %v1010
        %v1014 = vxor.u32 %v1013, 2147483648
        %v1015 = vsel %vm932, %v1014, %v1013
        %v1016 = vsub.s32 4, %v992
        %v1017 = vsel %vm932, %v1016, %v992
        %v1018 = vsel %vm931, %v506, %v1015
        %v1019 = vsel %vm931, 0, %v1017
        %v1020 = vcosq.f32.pop %v1018
        %v1021 = vsinq.f32.pop %v1018
        %vm1022 = vweird.f32 %v506
        %v1023 = vadd.s32 %v1019, 3
        %v1024 = vand.u32 %v1023, 3
        %vm1025 = vcmp.lt.s32.totalorder %v1024, 2
        %vm1026 = vcmp.eq.s32.totalorder %v1024, 0
        %v1027 = vxor.u32 %v1021, 2147483648
        %v1028 = vsel %vm1026, %v1020, %v1027
        %vm1029 = vcmp.eq.s32.totalorder %v1024, 2
        %v1030 = vxor.u32 %v1020, 2147483648
        %v1031 = vsel %vm1029, %v1030, %v1021
        %v1032 = vsel %vm1025, %v1028, %v1031
        %v1033 = vsel %vm1022, nan, %v1032
        %v1034 = vand.u32 2147483647, %v507
        %vm1035 = vcmp.le.f32.partialorder %v1034, 0.7853982
        %vm1036 = vcmp.lt.s32.totalorder %v507, 0
        %v1037 = vand.u32 %v507, 2139095040
        %v1038 = vshrl.u32 %v1037, 23
        %v1039 = vsub.s32 %v1038, 127
        %v1040 = vand.u32 2147483647, %v507
        %v1041 = vand.u32 %v1040, 8388607
        %v1042 = vor.u32 %v1041, 8388608
        %v1043 = vsub.s32 0, %v1042
        %v1044 = vadd.s32 %v1039, 1
        %vm1045 = vcmp.gt.s32.totalorder %v1044, 0
        %v1046 = vsel %vm1045, %v1044, 0
        %v1047 = vshrl.u32 %v1046, 5
        %v1048 = vand.u32 %v1046, 31
        %v1049 = vsub.s32 32, %v1048
        %v1050 = vshrl.u32 683565275, %v1049
        %v1051 = vshll.u32 683565275, %v1048
        %v1052 = vshrl.u32 2475754826, %v1049
        %v1053 = vor.u32 %v1051, %v1052
        %v1054 = vshll.u32 2475754826, %v1048
        %v1055 = vshrl.u32 2131351028, %v1049
        %v1056 = vor.u32 %v1054, %v1055
        %v1057 = vshll.u32 2131351028, %v1048
        %v1058 = vshrl.u32 2102212464, %v1049
        %v1059 = vor.u32 %v1057, %v1058
        %v1060 = vshll.u32 2102212464, %v1048
        %v1061 = vshrl.u32 920167782, %v1049
        %v1062 = vor.u32 %v1060, %v1061
        %v1063 = vshll.u32 920167782, %v1048
        %v1064 = vshrl.u32 1326507024, %v1049
        %v1065 = vor.u32 %v1063, %v1064
        %vm1066 = vcmp.lt.s32.totalorder %v1047, 1
        %vm1067 = vcmp.lt.s32.totalorder %v1047, 2
        %vm1068 = vcmp.lt.s32.totalorder %v1047, 3
        %vm1069 = vcmp.lt.s32.totalorder %v1047, 4
        %v1070 = vsel %vm1066, %v1050, %v1053
        %v1071 = vsel %vm1069, %v1059, 2102212464
        %v1072 = vsel %vm1068, %v1056, %v1071
        %v1073 = vsel %vm1067, %v1070, %v1072
        %v1074 = vsel %vm1066, %v1053, %v1056
        %v1075 = vsel %vm1069, %v1062, 920167782
        %v1076 = vsel %vm1068, %v1059, %v1075
        %v1077 = vsel %vm1067, %v1074, %v1076
        %v1078 = vsel %vm1066, %v1056, %v1059
        %v1079 = vsel %vm1069, %v1065, 1326507024
        %v1080 = vsel %vm1068, %v1062, %v1079
        %v1081 = vsel %vm1067, %v1078, %v1080
        %v1082 = vshll.u32 %v1042, 8
        %v1083 = vmul.u32.u64.compose %v1082, %v1081
        %v1084 = vextract.low.u32 %v1083
        %v1085 = vextract.high.u32 %v1083
        %v1086 = vmul.u32.u64.compose %v1082, %v1077
        %v1087 = vextract.low.u32 %v1086
        %v1088 = vextract.high.u32 %v1086
        %v1089 = vmul.u32 %v1082, %v1073
        %v1090 = vadd.s32 %v1085, %v1087
        %vm1091 = vc.u32 %v1085, %v1087
        %v1092 = vadd.s32 %v1088, 1
        %v1093 = vsel %vm1091, %v1092, %v1088
        %v1094 = vadd.s32 %v1089, %v1093
        %v1095 = vadd.s32 %v1094, 536870912
        %v1096 = vshrl.u32 %v1095, 30
        %v1097 = vshll.u32 %v1096, 30
        %v1098 = vsub.s32 %v1094, %v1097
        %vm1099 = vcmp.lt.s32.totalorder %v1098, 0
        %v1100 = vsub.s32 0, %v1098
        %v1101 = vsel %vm1099, %v1100, %v1098
        %v1102 = vclz %v1101
        %v1103 = vsub.s32 %v1102, 2
        %vm1104 = vcmp.gt.s32.totalorder 0, %v1103
        %v1105 = vsel %vm1104, 0, %v1103
        %v1106 = vsub.s32 32, %v1105
        %v1107 = vshll.u32 %v1098, %v1105
        %v1108 = vshrl.u32 %v1090, %v1106
        %v1109 = vor.u32 %v1107, %v1108
        %v1110 = vsub.s32 4294967266, %v1105
        %v1111 = vadd.s32 %v1110, 127
        %v1112 = vshll.u32 %v1111, 23
        %v1113 = vor.u32 4788187, %v1112
        %v1114 = vand.u32 2147483647, %v1113
        %v1116 = vcvt.s32.f32 %v1109
        %v1117 = vmul.f32 %v1116, %v1114
        %v1118 = vxor.u32 %v1117, 2147483648
        %v1119 = vsel %vm1036, %v1118, %v1117
        %v1120 = vsub.s32 4, %v1096
        %v1121 = vsel %vm1036, %v1120, %v1096
        %v1122 = vsel %vm1035, %v507, %v1119
        %v1123 = vsel %vm1035, 0, %v1121
        %v1124 = vcosq.f32.pop %v1122
        %v1125 = vsinq.f32.pop %v1122
        %vm1126 = vweird.f32 %v507
        %v1127 = vadd.s32 %v1123, 3
        %v1128 = vand.u32 %v1127, 3
        %vm1129 = vcmp.lt.s32.totalorder %v1128, 2
        %vm1130 = vcmp.eq.s32.totalorder %v1128, 0
        %v1131 = vxor.u32 %v1125, 2147483648
        %v1132 = vsel %vm1130, %v1124, %v1131
        %vm1133 = vcmp.eq.s32.totalorder %v1128, 2
        %v1134 = vxor.u32 %v1124, 2147483648
        %v1135 = vsel %vm1133, %v1134, %v1125
        %v1136 = vsel %vm1129, %v1132, %v1135
        %v1137 = vsel %vm1126, nan, %v1136
        %v1138 = vand.u32 2147483647, %v508
        %vm1139 = vcmp.le.f32.partialorder %v1138, 0.7853982
        %vm1140 = vcmp.lt.s32.totalorder %v508, 0
        %v1141 = vand.u32 %v508, 2139095040
        %v1142 = vshrl.u32 %v1141, 23
        %v1143 = vsub.s32 %v1142, 127
        %v1144 = vand.u32 2147483647, %v508
        %v1145 = vand.u32 %v1144, 8388607
        %v1146 = vor.u32 %v1145, 8388608
        %v1147 = vsub.s32 0, %v1146
        %v1148 = vadd.s32 %v1143, 1
        %vm1149 = vcmp.gt.s32.totalorder %v1148, 0
        %v1150 = vsel %vm1149, %v1148, 0
        %v1151 = vshrl.u32 %v1150, 5
        %v1152 = vand.u32 %v1150, 31
        %v1153 = vsub.s32 32, %v1152
        %v1154 = vshrl.u32 683565275, %v1153
        %v1155 = vshll.u32 683565275, %v1152
        %v1156 = vshrl.u32 2475754826, %v1153
        %v1157 = vor.u32 %v1155, %v1156
        %v1158 = vshll.u32 2475754826, %v1152
        %v1159 = vshrl.u32 2131351028, %v1153
        %v1160 = vor.u32 %v1158, %v1159
        %v1161 = vshll.u32 2131351028, %v1152
        %v1162 = vshrl.u32 2102212464, %v1153
        %v1163 = vor.u32 %v1161, %v1162
        %v1164 = vshll.u32 2102212464, %v1152
        %v1165 = vshrl.u32 920167782, %v1153
        %v1166 = vor.u32 %v1164, %v1165
        %v1167 = vshll.u32 920167782, %v1152
        %v1168 = vshrl.u32 1326507024, %v1153
        %v1169 = vor.u32 %v1167, %v1168
        %vm1170 = vcmp.lt.s32.totalorder %v1151, 1
        %vm1171 = vcmp.lt.s32.totalorder %v1151, 2
        %vm1172 = vcmp.lt.s32.totalorder %v1151, 3
        %vm1173 = vcmp.lt.s32.totalorder %v1151, 4
        %v1174 = vsel %vm1170, %v1154, %v1157
        %v1175 = vsel %vm1173, %v1163, 2102212464
        %v1176 = vsel %vm1172, %v1160, %v1175
        %v1177 = vsel %vm1171, %v1174, %v1176
        %v1178 = vsel %vm1170, %v1157, %v1160
        %v1179 = vsel %vm1173, %v1166, 920167782
        %v1180 = vsel %vm1172, %v1163, %v1179
        %v1181 = vsel %vm1171, %v1178, %v1180
        %v1182 = vsel %vm1170, %v1160, %v1163
        %v1183 = vsel %vm1173, %v1169, 1326507024
        %v1184 = vsel %vm1172, %v1166, %v1183
        %v1185 = vsel %vm1171, %v1182, %v1184
        %v1186 = vshll.u32 %v1146, 8
        %v1187 = vmul.u32.u64.compose %v1186, %v1185
        %v1188 = vextract.low.u32 %v1187
        %v1189 = vextract.high.u32 %v1187
        %v1190 = vmul.u32.u64.compose %v1186, %v1181
        %v1191 = vextract.low.u32 %v1190
        %v1192 = vextract.high.u32 %v1190
        %v1193 = vmul.u32 %v1186, %v1177
        %v1194 = vadd.s32 %v1189, %v1191
        %vm1195 = vc.u32 %v1189, %v1191
        %v1196 = vadd.s32 %v1192, 1
        %v1197 = vsel %vm1195, %v1196, %v1192
        %v1198 = vadd.s32 %v1193, %v1197
        %v1199 = vadd.s32 %v1198, 536870912
        %v1200 = vshrl.u32 %v1199, 30
        %v1201 = vshll.u32 %v1200, 30
        %v1202 = vsub.s32 %v1198, %v1201
        %vm1203 = vcmp.lt.s32.totalorder %v1202, 0
        %v1204 = vsub.s32 0, %v1202
        %v1205 = vsel %vm1203, %v1204, %v1202
        %v1206 = vclz %v1205
        %v1207 = vsub.s32 %v1206, 2
        %vm1208 = vcmp.gt.s32.totalorder 0, %v1207
        %v1209 = vsel %vm1208, 0, %v1207
        %v1210 = vsub.s32 32, %v1209
        %v1211 = vshll.u32 %v1202, %v1209
        %v1212 = vshrl.u32 %v1194, %v1210
        %v1213 = vor.u32 %v1211, %v1212
        %v1214 = vsub.s32 4294967266, %v1209
        %v1215 = vadd.s32 %v1214, 127
        %v1216 = vshll.u32 %v1215, 23
        %v1217 = vor.u32 4788187, %v1216
        %v1218 = vand.u32 2147483647, %v1217
        %v1220 = vcvt.s32.f32 %v1213
        %v1221 = vmul.f32 %v1220, %v1218
        %v1222 = vxor.u32 %v1221, 2147483648
        %v1223 = vsel %vm1140, %v1222, %v1221
        %v1224 = vsub.s32 4, %v1200
        %v1225 = vsel %vm1140, %v1224, %v1200
        %v1226 = vsel %vm1139, %v508, %v1223
        %v1227 = vsel %vm1139, 0, %v1225
        %v1228 = vcosq.f32.pop %v1226
        %v1229 = vsinq.f32.pop %v1226
        %vm1230 = vweird.f32 %v508
        %v1231 = vadd.s32 %v1227, 3
        %v1232 = vand.u32 %v1231, 3
        %vm1233 = vcmp.lt.s32.totalorder %v1232, 2
        %vm1234 = vcmp.eq.s32.totalorder %v1232, 0
        %v1235 = vxor.u32 %v1229, 2147483648
        %v1236 = vsel %vm1234, %v1228, %v1235
        %vm1237 = vcmp.eq.s32.totalorder %v1232, 2
        %v1238 = vxor.u32 %v1228, 2147483648
        %v1239 = vsel %vm1237, %v1238, %v1229
        %v1240 = vsel %vm1233, %v1236, %v1239
        %v1241 = vsel %vm1230, nan, %v1240
        %v1242 = vand.u32 2147483647, %v509
        %vm1243 = vcmp.le.f32.partialorder %v1242, 0.7853982
        %vm1244 = vcmp.lt.s32.totalorder %v509, 0
        %v1245 = vand.u32 %v509, 2139095040
        %v1246 = vshrl.u32 %v1245, 23
        %v1247 = vsub.s32 %v1246, 127
        %v1248 = vand.u32 2147483647, %v509
        %v1249 = vand.u32 %v1248, 8388607
        %v1250 = vor.u32 %v1249, 8388608
        %v1251 = vsub.s32 0, %v1250
        %v1252 = vadd.s32 %v1247, 1
        %vm1253 = vcmp.gt.s32.totalorder %v1252, 0
        %v1254 = vsel %vm1253, %v1252, 0
        %v1255 = vshrl.u32 %v1254, 5
        %v1256 = vand.u32 %v1254, 31
        %v1257 = vsub.s32 32, %v1256
        %v1258 = vshrl.u32 683565275, %v1257
        %v1259 = vshll.u32 683565275, %v1256
        %v1260 = vshrl.u32 2475754826, %v1257
        %v1261 = vor.u32 %v1259, %v1260
        %v1262 = vshll.u32 2475754826, %v1256
        %v1263 = vshrl.u32 2131351028, %v1257
        %v1264 = vor.u32 %v1262, %v1263
        %v1265 = vshll.u32 2131351028, %v1256
        %v1266 = vshrl.u32 2102212464, %v1257
        %v1267 = vor.u32 %v1265, %v1266
        %v1268 = vshll.u32 2102212464, %v1256
        %v1269 = vshrl.u32 920167782, %v1257
        %v1270 = vor.u32 %v1268, %v1269
        %v1271 = vshll.u32 920167782, %v1256
        %v1272 = vshrl.u32 1326507024, %v1257
        %v1273 = vor.u32 %v1271, %v1272
        %vm1274 = vcmp.lt.s32.totalorder %v1255, 1
        %vm1275 = vcmp.lt.s32.totalorder %v1255, 2
        %vm1276 = vcmp.lt.s32.totalorder %v1255, 3
        %vm1277 = vcmp.lt.s32.totalorder %v1255, 4
        %v1278 = vsel %vm1274, %v1258, %v1261
        %v1279 = vsel %vm1277, %v1267, 2102212464
        %v1280 = vsel %vm1276, %v1264, %v1279
        %v1281 = vsel %vm1275, %v1278, %v1280
        %v1282 = vsel %vm1274, %v1261, %v1264
        %v1283 = vsel %vm1277, %v1270, 920167782
        %v1284 = vsel %vm1276, %v1267, %v1283
        %v1285 = vsel %vm1275, %v1282, %v1284
        %v1286 = vsel %vm1274, %v1264, %v1267
        %v1287 = vsel %vm1277, %v1273, 1326507024
        %v1288 = vsel %vm1276, %v1270, %v1287
        %v1289 = vsel %vm1275, %v1286, %v1288
        %v1290 = vshll.u32 %v1250, 8
        %v1291 = vmul.u32.u64.compose %v1290, %v1289
        %v1292 = vextract.low.u32 %v1291
        %v1293 = vextract.high.u32 %v1291
        %v1294 = vmul.u32.u64.compose %v1290, %v1285
        %v1295 = vextract.low.u32 %v1294
        %v1296 = vextract.high.u32 %v1294
        %v1297 = vmul.u32 %v1290, %v1281
        %v1298 = vadd.s32 %v1293, %v1295
        %vm1299 = vc.u32 %v1293, %v1295
        %v1300 = vadd.s32 %v1296, 1
        %v1301 = vsel %vm1299, %v1300, %v1296
        %v1302 = vadd.s32 %v1297, %v1301
        %v1303 = vadd.s32 %v1302, 536870912
        %v1304 = vshrl.u32 %v1303, 30
        %v1305 = vshll.u32 %v1304, 30
        %v1306 = vsub.s32 %v1302, %v1305
        %vm1307 = vcmp.lt.s32.totalorder %v1306, 0
        %v1308 = vsub.s32 0, %v1306
        %v1309 = vsel %vm1307, %v1308, %v1306
        %v1310 = vclz %v1309
        %v1311 = vsub.s32 %v1310, 2
        %vm1312 = vcmp.gt.s32.totalorder 0, %v1311
        %v1313 = vsel %vm1312, 0, %v1311
        %v1314 = vsub.s32 32, %v1313
        %v1315 = vshll.u32 %v1306, %v1313
        %v1316 = vshrl.u32 %v1298, %v1314
        %v1317 = vor.u32 %v1315, %v1316
        %v1318 = vsub.s32 4294967266, %v1313
        %v1319 = vadd.s32 %v1318, 127
        %v1320 = vshll.u32 %v1319, 23
        %v1321 = vor.u32 4788187, %v1320
        %v1322 = vand.u32 2147483647, %v1321
        %v1324 = vcvt.s32.f32 %v1317
        %v1325 = vmul.f32 %v1324, %v1322
        %v1326 = vxor.u32 %v1325, 2147483648
        %v1327 = vsel %vm1244, %v1326, %v1325
        %v1328 = vsub.s32 4, %v1304
        %v1329 = vsel %vm1244, %v1328, %v1304
        %v1330 = vsel %vm1243, %v509, %v1327
        %v1331 = vsel %vm1243, 0, %v1329
        %v1332 = vcosq.f32.pop %v1330
        %v1333 = vsinq.f32.pop %v1330
        %vm1334 = vweird.f32 %v509
        %v1335 = vadd.s32 %v1331, 3
        %v1336 = vand.u32 %v1335, 3
        %vm1337 = vcmp.lt.s32.totalorder %v1336, 2
        %vm1338 = vcmp.eq.s32.totalorder %v1336, 0
        %v1339 = vxor.u32 %v1333, 2147483648
        %v1340 = vsel %vm1338, %v1332, %v1339
        %vm1341 = vcmp.eq.s32.totalorder %v1336, 2
        %v1342 = vxor.u32 %v1332, 2147483648
        %v1343 = vsel %vm1341, %v1342, %v1333
        %v1344 = vsel %vm1337, %v1340, %v1343
        %v1345 = vsel %vm1334, nan, %v1344
        %v1346 = vand.u32 2147483647, %v510
        %vm1347 = vcmp.le.f32.partialorder %v1346, 0.7853982
        %vm1348 = vcmp.lt.s32.totalorder %v510, 0
        %v1349 = vand.u32 %v510, 2139095040
        %v1350 = vshrl.u32 %v1349, 23
        %v1351 = vsub.s32 %v1350, 127
        %v1352 = vand.u32 2147483647, %v510
        %v1353 = vand.u32 %v1352, 8388607
        %v1354 = vor.u32 %v1353, 8388608
        %v1355 = vsub.s32 0, %v1354
        %v1356 = vadd.s32 %v1351, 1
        %vm1357 = vcmp.gt.s32.totalorder %v1356, 0
        %v1358 = vsel %vm1357, %v1356, 0
        %v1359 = vshrl.u32 %v1358, 5
        %v1360 = vand.u32 %v1358, 31
        %v1361 = vsub.s32 32, %v1360
        %v1362 = vshrl.u32 683565275, %v1361
        %v1363 = vshll.u32 683565275, %v1360
        %v1364 = vshrl.u32 2475754826, %v1361
        %v1365 = vor.u32 %v1363, %v1364
        %v1366 = vshll.u32 2475754826, %v1360
        %v1367 = vshrl.u32 2131351028, %v1361
        %v1368 = vor.u32 %v1366, %v1367
        %v1369 = vshll.u32 2131351028, %v1360
        %v1370 = vshrl.u32 2102212464, %v1361
        %v1371 = vor.u32 %v1369, %v1370
        %v1372 = vshll.u32 2102212464, %v1360
        %v1373 = vshrl.u32 920167782, %v1361
        %v1374 = vor.u32 %v1372, %v1373
        %v1375 = vshll.u32 920167782, %v1360
        %v1376 = vshrl.u32 1326507024, %v1361
        %v1377 = vor.u32 %v1375, %v1376
        %vm1378 = vcmp.lt.s32.totalorder %v1359, 1
        %vm1379 = vcmp.lt.s32.totalorder %v1359, 2
        %vm1380 = vcmp.lt.s32.totalorder %v1359, 3
        %vm1381 = vcmp.lt.s32.totalorder %v1359, 4
        %v1382 = vsel %vm1378, %v1362, %v1365
        %v1383 = vsel %vm1381, %v1371, 2102212464
        %v1384 = vsel %vm1380, %v1368, %v1383
        %v1385 = vsel %vm1379, %v1382, %v1384
        %v1386 = vsel %vm1378, %v1365, %v1368
        %v1387 = vsel %vm1381, %v1374, 920167782
        %v1388 = vsel %vm1380, %v1371, %v1387
        %v1389 = vsel %vm1379, %v1386, %v1388
        %v1390 = vsel %vm1378, %v1368, %v1371
        %v1391 = vsel %vm1381, %v1377, 1326507024
        %v1392 = vsel %vm1380, %v1374, %v1391
        %v1393 = vsel %vm1379, %v1390, %v1392
        %v1394 = vshll.u32 %v1354, 8
        %v1395 = vmul.u32.u64.compose %v1394, %v1393
        %v1396 = vextract.low.u32 %v1395
        %v1397 = vextract.high.u32 %v1395
        %v1398 = vmul.u32.u64.compose %v1394, %v1389
        %v1399 = vextract.low.u32 %v1398
        %v1400 = vextract.high.u32 %v1398
        %v1401 = vmul.u32 %v1394, %v1385
        %v1402 = vadd.s32 %v1397, %v1399
        %vm1403 = vc.u32 %v1397, %v1399
        %v1404 = vadd.s32 %v1400, 1
        %v1405 = vsel %vm1403, %v1404, %v1400
        %v1406 = vadd.s32 %v1401, %v1405
        %v1407 = vadd.s32 %v1406, 536870912
        %v1408 = vshrl.u32 %v1407, 30
        %v1409 = vshll.u32 %v1408, 30
        %v1410 = vsub.s32 %v1406, %v1409
        %vm1411 = vcmp.lt.s32.totalorder %v1410, 0
        %v1412 = vsub.s32 0, %v1410
        %v1413 = vsel %vm1411, %v1412, %v1410
        %v1414 = vclz %v1413
        %v1415 = vsub.s32 %v1414, 2
        %vm1416 = vcmp.gt.s32.totalorder 0, %v1415
        %v1417 = vsel %vm1416, 0, %v1415
        %v1418 = vsub.s32 32, %v1417
        %v1419 = vshll.u32 %v1410, %v1417
        %v1420 = vshrl.u32 %v1402, %v1418
        %v1421 = vor.u32 %v1419, %v1420
        %v1422 = vsub.s32 4294967266, %v1417
        %v1423 = vadd.s32 %v1422, 127
        %v1424 = vshll.u32 %v1423, 23
        %v1425 = vor.u32 4788187, %v1424
        %v1426 = vand.u32 2147483647, %v1425
        %v1428 = vcvt.s32.f32 %v1421
        %v1429 = vmul.f32 %v1428, %v1426
        %v1430 = vxor.u32 %v1429, 2147483648
        %v1431 = vsel %vm1348, %v1430, %v1429
        %v1432 = vsub.s32 4, %v1408
        %v1433 = vsel %vm1348, %v1432, %v1408
        %v1434 = vsel %vm1347, %v510, %v1431
        %v1435 = vsel %vm1347, 0, %v1433
        %v1436 = vcosq.f32.pop %v1434
        %v1437 = vsinq.f32.pop %v1434
        %vm1438 = vweird.f32 %v510
        %v1439 = vadd.s32 %v1435, 3
        %v1440 = vand.u32 %v1439, 3
        %vm1441 = vcmp.lt.s32.totalorder %v1440, 2
        %vm1442 = vcmp.eq.s32.totalorder %v1440, 0
        %v1443 = vxor.u32 %v1437, 2147483648
        %v1444 = vsel %vm1442, %v1436, %v1443
        %vm1445 = vcmp.eq.s32.totalorder %v1440, 2
        %v1446 = vxor.u32 %v1436, 2147483648
        %v1447 = vsel %vm1445, %v1446, %v1437
        %v1448 = vsel %vm1441, %v1444, %v1447
        %v1449 = vsel %vm1438, nan, %v1448
        %v1450 = vand.u32 2147483647, %v511
        %vm1451 = vcmp.le.f32.partialorder %v1450, 0.7853982
        %vm1452 = vcmp.lt.s32.totalorder %v511, 0
        %v1453 = vand.u32 %v511, 2139095040
        %v1454 = vshrl.u32 %v1453, 23
        %v1455 = vsub.s32 %v1454, 127
        %v1456 = vand.u32 2147483647, %v511
        %v1457 = vand.u32 %v1456, 8388607
        %v1458 = vor.u32 %v1457, 8388608
        %v1459 = vsub.s32 0, %v1458
        %v1460 = vadd.s32 %v1455, 1
        %vm1461 = vcmp.gt.s32.totalorder %v1460, 0
        %v1462 = vsel %vm1461, %v1460, 0
        %v1463 = vshrl.u32 %v1462, 5
        %v1464 = vand.u32 %v1462, 31
        %v1465 = vsub.s32 32, %v1464
        %v1466 = vshrl.u32 683565275, %v1465
        %v1467 = vshll.u32 683565275, %v1464
        %v1468 = vshrl.u32 2475754826, %v1465
        %v1469 = vor.u32 %v1467, %v1468
        %v1470 = vshll.u32 2475754826, %v1464
        %v1471 = vshrl.u32 2131351028, %v1465
        %v1472 = vor.u32 %v1470, %v1471
        %v1473 = vshll.u32 2131351028, %v1464
        %v1474 = vshrl.u32 2102212464, %v1465
        %v1475 = vor.u32 %v1473, %v1474
        %v1476 = vshll.u32 2102212464, %v1464
        %v1477 = vshrl.u32 920167782, %v1465
        %v1478 = vor.u32 %v1476, %v1477
        %v1479 = vshll.u32 920167782, %v1464
        %v1480 = vshrl.u32 1326507024, %v1465
        %v1481 = vor.u32 %v1479, %v1480
        %vm1482 = vcmp.lt.s32.totalorder %v1463, 1
        %vm1483 = vcmp.lt.s32.totalorder %v1463, 2
        %vm1484 = vcmp.lt.s32.totalorder %v1463, 3
        %vm1485 = vcmp.lt.s32.totalorder %v1463, 4
        %v1486 = vsel %vm1482, %v1466, %v1469
        %v1487 = vsel %vm1485, %v1475, 2102212464
        %v1488 = vsel %vm1484, %v1472, %v1487
        %v1489 = vsel %vm1483, %v1486, %v1488
        %v1490 = vsel %vm1482, %v1469, %v1472
        %v1491 = vsel %vm1485, %v1478, 920167782
        %v1492 = vsel %vm1484, %v1475, %v1491
        %v1493 = vsel %vm1483, %v1490, %v1492
        %v1494 = vsel %vm1482, %v1472, %v1475
        %v1495 = vsel %vm1485, %v1481, 1326507024
        %v1496 = vsel %vm1484, %v1478, %v1495
        %v1497 = vsel %vm1483, %v1494, %v1496
        %v1498 = vshll.u32 %v1458, 8
        %v1499 = vmul.u32.u64.compose %v1498, %v1497
        %v1500 = vextract.low.u32 %v1499
        %v1501 = vextract.high.u32 %v1499
        %v1502 = vmul.u32.u64.compose %v1498, %v1493
        %v1503 = vextract.low.u32 %v1502
        %v1504 = vextract.high.u32 %v1502
        %v1505 = vmul.u32 %v1498, %v1489
        %v1506 = vadd.s32 %v1501, %v1503
        %vm1507 = vc.u32 %v1501, %v1503
        %v1508 = vadd.s32 %v1504, 1
        %v1509 = vsel %vm1507, %v1508, %v1504
        %v1510 = vadd.s32 %v1505, %v1509
        %v1511 = vadd.s32 %v1510, 536870912
        %v1512 = vshrl.u32 %v1511, 30
        %v1513 = vshll.u32 %v1512, 30
        %v1514 = vsub.s32 %v1510, %v1513
        %vm1515 = vcmp.lt.s32.totalorder %v1514, 0
        %v1516 = vsub.s32 0, %v1514
        %v1517 = vsel %vm1515, %v1516, %v1514
        %v1518 = vclz %v1517
        %v1519 = vsub.s32 %v1518, 2
        %vm1520 = vcmp.gt.s32.totalorder 0, %v1519
        %v1521 = vsel %vm1520, 0, %v1519
        %v1522 = vsub.s32 32, %v1521
        %v1523 = vshll.u32 %v1514, %v1521
        %v1524 = vshrl.u32 %v1506, %v1522
        %v1525 = vor.u32 %v1523, %v1524
        %v1526 = vsub.s32 4294967266, %v1521
        %v1527 = vadd.s32 %v1526, 127
        %v1528 = vshll.u32 %v1527, 23
        %v1529 = vor.u32 4788187, %v1528
        %v1530 = vand.u32 2147483647, %v1529
        %v1532 = vcvt.s32.f32 %v1525
        %v1533 = vmul.f32 %v1532, %v1530
        %v1534 = vxor.u32 %v1533, 2147483648
        %v1535 = vsel %vm1452, %v1534, %v1533
        %v1536 = vsub.s32 4, %v1512
        %v1537 = vsel %vm1452, %v1536, %v1512
        %v1538 = vsel %vm1451, %v511, %v1535
        %v1539 = vsel %vm1451, 0, %v1537
        %v1540 = vcosq.f32.pop %v1538
        %v1541 = vsinq.f32.pop %v1538
        %vm1542 = vweird.f32 %v511
        %v1543 = vadd.s32 %v1539, 3
        %v1544 = vand.u32 %v1543, 3
        %vm1545 = vcmp.lt.s32.totalorder %v1544, 2
        %vm1546 = vcmp.eq.s32.totalorder %v1544, 0
        %v1547 = vxor.u32 %v1541, 2147483648
        %v1548 = vsel %vm1546, %v1540, %v1547
        %vm1549 = vcmp.eq.s32.totalorder %v1544, 2
        %v1550 = vxor.u32 %v1540, 2147483648
        %v1551 = vsel %vm1549, %v1550, %v1541
        %v1552 = vsel %vm1545, %v1548, %v1551
        %v1553 = vsel %vm1542, nan, %v1552
        %v1554 = vand.u32 2147483647, %v512
        %vm1555 = vcmp.le.f32.partialorder %v1554, 0.7853982
        %vm1556 = vcmp.lt.s32.totalorder %v512, 0
        %v1557 = vand.u32 %v512, 2139095040
        %v1558 = vshrl.u32 %v1557, 23
        %v1559 = vsub.s32 %v1558, 127
        %v1560 = vand.u32 2147483647, %v512
        %v1561 = vand.u32 %v1560, 8388607
        %v1562 = vor.u32 %v1561, 8388608
        %v1563 = vsub.s32 0, %v1562
        %v1564 = vadd.s32 %v1559, 1
        %vm1565 = vcmp.gt.s32.totalorder %v1564, 0
        %v1566 = vsel %vm1565, %v1564, 0
        %v1567 = vshrl.u32 %v1566, 5
        %v1568 = vand.u32 %v1566, 31
        %v1569 = vsub.s32 32, %v1568
        %v1570 = vshrl.u32 683565275, %v1569
        %v1571 = vshll.u32 683565275, %v1568
        %v1572 = vshrl.u32 2475754826, %v1569
        %v1573 = vor.u32 %v1571, %v1572
        %v1574 = vshll.u32 2475754826, %v1568
        %v1575 = vshrl.u32 2131351028, %v1569
        %v1576 = vor.u32 %v1574, %v1575
        %v1577 = vshll.u32 2131351028, %v1568
        %v1578 = vshrl.u32 2102212464, %v1569
        %v1579 = vor.u32 %v1577, %v1578
        %v1580 = vshll.u32 2102212464, %v1568
        %v1581 = vshrl.u32 920167782, %v1569
        %v1582 = vor.u32 %v1580, %v1581
        %v1583 = vshll.u32 920167782, %v1568
        %v1584 = vshrl.u32 1326507024, %v1569
        %v1585 = vor.u32 %v1583, %v1584
        %vm1586 = vcmp.lt.s32.totalorder %v1567, 1
        %vm1587 = vcmp.lt.s32.totalorder %v1567, 2
        %vm1588 = vcmp.lt.s32.totalorder %v1567, 3
        %vm1589 = vcmp.lt.s32.totalorder %v1567, 4
        %v1590 = vsel %vm1586, %v1570, %v1573
        %v1591 = vsel %vm1589, %v1579, 2102212464
        %v1592 = vsel %vm1588, %v1576, %v1591
        %v1593 = vsel %vm1587, %v1590, %v1592
        %v1594 = vsel %vm1586, %v1573, %v1576
        %v1595 = vsel %vm1589, %v1582, 920167782
        %v1596 = vsel %vm1588, %v1579, %v1595
        %v1597 = vsel %vm1587, %v1594, %v1596
        %v1598 = vsel %vm1586, %v1576, %v1579
        %v1599 = vsel %vm1589, %v1585, 1326507024
        %v1600 = vsel %vm1588, %v1582, %v1599
        %v1601 = vsel %vm1587, %v1598, %v1600
        %v1602 = vshll.u32 %v1562, 8
        %v1603 = vmul.u32.u64.compose %v1602, %v1601
        %v1604 = vextract.low.u32 %v1603
        %v1605 = vextract.high.u32 %v1603
        %v1606 = vmul.u32.u64.compose %v1602, %v1597
        %v1607 = vextract.low.u32 %v1606
        %v1608 = vextract.high.u32 %v1606
        %v1609 = vmul.u32 %v1602, %v1593
        %v1610 = vadd.s32 %v1605, %v1607
        %vm1611 = vc.u32 %v1605, %v1607
        %v1612 = vadd.s32 %v1608, 1
        %v1613 = vsel %vm1611, %v1612, %v1608
        %v1614 = vadd.s32 %v1609, %v1613
        %v1615 = vadd.s32 %v1614, 536870912
        %v1616 = vshrl.u32 %v1615, 30
        %v1617 = vshll.u32 %v1616, 30
        %v1618 = vsub.s32 %v1614, %v1617
        %vm1619 = vcmp.lt.s32.totalorder %v1618, 0
        %v1620 = vsub.s32 0, %v1618
        %v1621 = vsel %vm1619, %v1620, %v1618
        %v1622 = vclz %v1621
        %v1623 = vsub.s32 %v1622, 2
        %vm1624 = vcmp.gt.s32.totalorder 0, %v1623
        %v1625 = vsel %vm1624, 0, %v1623
        %v1626 = vsub.s32 32, %v1625
        %v1627 = vshll.u32 %v1618, %v1625
        %v1628 = vshrl.u32 %v1610, %v1626
        %v1629 = vor.u32 %v1627, %v1628
        %v1630 = vsub.s32 4294967266, %v1625
        %v1631 = vadd.s32 %v1630, 127
        %v1632 = vshll.u32 %v1631, 23
        %v1633 = vor.u32 4788187, %v1632
        %v1634 = vand.u32 2147483647, %v1633
        %v1636 = vcvt.s32.f32 %v1629
        %v1637 = vmul.f32 %v1636, %v1634
        %v1638 = vxor.u32 %v1637, 2147483648
        %v1639 = vsel %vm1556, %v1638, %v1637
        %v1640 = vsub.s32 4, %v1616
        %v1641 = vsel %vm1556, %v1640, %v1616
        %v1642 = vsel %vm1555, %v512, %v1639
        %v1643 = vsel %vm1555, 0, %v1641
        %v1644 = vcosq.f32.pop %v1642
        %v1645 = vsinq.f32.pop %v1642
        %vm1646 = vweird.f32 %v512
        %v1647 = vadd.s32 %v1643, 3
        %v1648 = vand.u32 %v1647, 3
        %vm1649 = vcmp.lt.s32.totalorder %v1648, 2
        %vm1650 = vcmp.eq.s32.totalorder %v1648, 0
        %v1651 = vxor.u32 %v1645, 2147483648
        %v1652 = vsel %vm1650, %v1644, %v1651
        %vm1653 = vcmp.eq.s32.totalorder %v1648, 2
        %v1654 = vxor.u32 %v1644, 2147483648
        %v1655 = vsel %vm1653, %v1654, %v1645
        %v1656 = vsel %vm1649, %v1652, %v1655
        %v1657 = vsel %vm1646, nan, %v1656
        %v1658 = vand.u32 2147483647, %v513
        %vm1659 = vcmp.le.f32.partialorder %v1658, 0.7853982
        %vm1660 = vcmp.lt.s32.totalorder %v513, 0
        %v1661 = vand.u32 %v513, 2139095040
        %v1662 = vshrl.u32 %v1661, 23
        %v1663 = vsub.s32 %v1662, 127
        %v1664 = vand.u32 2147483647, %v513
        %v1665 = vand.u32 %v1664, 8388607
        %v1666 = vor.u32 %v1665, 8388608
        %v1667 = vsub.s32 0, %v1666
        %v1668 = vadd.s32 %v1663, 1
        %vm1669 = vcmp.gt.s32.totalorder %v1668, 0
        %v1670 = vsel %vm1669, %v1668, 0
        %v1671 = vshrl.u32 %v1670, 5
        %v1672 = vand.u32 %v1670, 31
        %v1673 = vsub.s32 32, %v1672
        %v1674 = vshrl.u32 683565275, %v1673
        %v1675 = vshll.u32 683565275, %v1672
        %v1676 = vshrl.u32 2475754826, %v1673
        %v1677 = vor.u32 %v1675, %v1676
        %v1678 = vshll.u32 2475754826, %v1672
        %v1679 = vshrl.u32 2131351028, %v1673
        %v1680 = vor.u32 %v1678, %v1679
        %v1681 = vshll.u32 2131351028, %v1672
        %v1682 = vshrl.u32 2102212464, %v1673
        %v1683 = vor.u32 %v1681, %v1682
        %v1684 = vshll.u32 2102212464, %v1672
        %v1685 = vshrl.u32 920167782, %v1673
        %v1686 = vor.u32 %v1684, %v1685
        %v1687 = vshll.u32 920167782, %v1672
        %v1688 = vshrl.u32 1326507024, %v1673
        %v1689 = vor.u32 %v1687, %v1688
        %vm1690 = vcmp.lt.s32.totalorder %v1671, 1
        %vm1691 = vcmp.lt.s32.totalorder %v1671, 2
        %vm1692 = vcmp.lt.s32.totalorder %v1671, 3
        %vm1693 = vcmp.lt.s32.totalorder %v1671, 4
        %v1694 = vsel %vm1690, %v1674, %v1677
        %v1695 = vsel %vm1693, %v1683, 2102212464
        %v1696 = vsel %vm1692, %v1680, %v1695
        %v1697 = vsel %vm1691, %v1694, %v1696
        %v1698 = vsel %vm1690, %v1677, %v1680
        %v1699 = vsel %vm1693, %v1686, 920167782
        %v1700 = vsel %vm1692, %v1683, %v1699
        %v1701 = vsel %vm1691, %v1698, %v1700
        %v1702 = vsel %vm1690, %v1680, %v1683
        %v1703 = vsel %vm1693, %v1689, 1326507024
        %v1704 = vsel %vm1692, %v1686, %v1703
        %v1705 = vsel %vm1691, %v1702, %v1704
        %v1706 = vshll.u32 %v1666, 8
        %v1707 = vmul.u32.u64.compose %v1706, %v1705
        %v1708 = vextract.low.u32 %v1707
        %v1709 = vextract.high.u32 %v1707
        %v1710 = vmul.u32.u64.compose %v1706, %v1701
        %v1711 = vextract.low.u32 %v1710
        %v1712 = vextract.high.u32 %v1710
        %v1713 = vmul.u32 %v1706, %v1697
        %v1714 = vadd.s32 %v1709, %v1711
        %vm1715 = vc.u32 %v1709, %v1711
        %v1716 = vadd.s32 %v1712, 1
        %v1717 = vsel %vm1715, %v1716, %v1712
        %v1718 = vadd.s32 %v1713, %v1717
        %v1719 = vadd.s32 %v1718, 536870912
        %v1720 = vshrl.u32 %v1719, 30
        %v1721 = vshll.u32 %v1720, 30
        %v1722 = vsub.s32 %v1718, %v1721
        %vm1723 = vcmp.lt.s32.totalorder %v1722, 0
        %v1724 = vsub.s32 0, %v1722
        %v1725 = vsel %vm1723, %v1724, %v1722
        %v1726 = vclz %v1725
        %v1727 = vsub.s32 %v1726, 2
        %vm1728 = vcmp.gt.s32.totalorder 0, %v1727
        %v1729 = vsel %vm1728, 0, %v1727
        %v1730 = vsub.s32 32, %v1729
        %v1731 = vshll.u32 %v1722, %v1729
        %v1732 = vshrl.u32 %v1714, %v1730
        %v1733 = vor.u32 %v1731, %v1732
        %v1734 = vsub.s32 4294967266, %v1729
        %v1735 = vadd.s32 %v1734, 127
        %v1736 = vshll.u32 %v1735, 23
        %v1737 = vor.u32 4788187, %v1736
        %v1738 = vand.u32 2147483647, %v1737
        %v1740 = vcvt.s32.f32 %v1733
        %v1741 = vmul.f32 %v1740, %v1738
        %v1742 = vxor.u32 %v1741, 2147483648
        %v1743 = vsel %vm1660, %v1742, %v1741
        %v1744 = vsub.s32 4, %v1720
        %v1745 = vsel %vm1660, %v1744, %v1720
        %v1746 = vsel %vm1659, %v513, %v1743
        %v1747 = vsel %vm1659, 0, %v1745
        %v1748 = vcosq.f32.pop %v1746
        %v1749 = vsinq.f32.pop %v1746
        %vm1750 = vweird.f32 %v513
        %v1751 = vadd.s32 %v1747, 3
        %v1752 = vand.u32 %v1751, 3
        %vm1753 = vcmp.lt.s32.totalorder %v1752, 2
        %vm1754 = vcmp.eq.s32.totalorder %v1752, 0
        %v1755 = vxor.u32 %v1749, 2147483648
        %v1756 = vsel %vm1754, %v1748, %v1755
        %vm1757 = vcmp.eq.s32.totalorder %v1752, 2
        %v1758 = vxor.u32 %v1748, 2147483648
        %v1759 = vsel %vm1757, %v1758, %v1749
        %v1760 = vsel %vm1753, %v1756, %v1759
        %v1761 = vsel %vm1750, nan, %v1760
        %1762 = vst [vmem:[%s267] sm:$0xff] %v617
        %1763 = vst [vmem:[%s267 + $0x8] sm:$0xff] %v721
        %1764 = vst [vmem:[%s267 + $0x10] sm:$0xff] %v825
        %1765 = vst [vmem:[%s267 + $0x18] sm:$0xff] %v929
        %1766 = vst [vmem:[%s267 + $0x20] sm:$0xff] %v1033
        %1767 = vst [vmem:[%s267 + $0x28] sm:$0xff] %v1137
        %1768 = vst [vmem:[%s267 + $0x30] sm:$0xff] %v1241
        %1769 = vst [vmem:[%s267 + $0x38] sm:$0xff] %v1345
        %1770 = vst [vmem:[%s267 + $0x40] sm:$0xff] %v1449
        %1771 = vst [vmem:[%s267 + $0x48] sm:$0xff] %v1553
        %1772 = vst [vmem:[%s267 + $0x50] sm:$0xff] %v1657
        %1773 = vst [vmem:[%s267 + $0x58] sm:$0xff] %v1761
        %s1774 = sand.u32 %s145, 1
        %s1775 = scalar_lea.sflag [#allocation3], %s1774
        %s1776 = sand.u32 %s145, 1
        %s1777 = smul.addr %s1776, 96
        %s1778 = scalar_lea.vmem [#allocation2], %s1777
        // Predicated region
        $region37: #{tpu_custom_call.1} parent=35 // pred_check
          %p1779 = pneg %p155
        $region38: #{tpu_custom_call.1} parent=35 // pred_check_branch
          %1781 = sbr.rel (%p1779) target = $region40
        $region39: #{tpu_custom_call.1} parent=35 // pred_region
          %s1782 = smul.u32 4, %s23
          %s1784 = ssub.s32 1536, 1536
          %1785 = vsyncadd %s1775, %s1784
          %s1786 = smul.addr %s1782, 3
          %s1787 = smul.addr %s22, 24
          %s1788 = sadd.s32 %s1786, %s1787
          %s1789 = smul.addr %s1788, 128
          %s1790 = scalar_lea.hbm %s4, %s1789
          %s1791 = sshll.u32 %s1778, 4
          %s1792 = int_to_ptr.vmem [resolvable:$true] %s1791
          %1797 = dma.vmem_to_hbm [thread:$0]  %s1792, 1536, %s1790, %s1775, 384, 384, 24
        $region40: #{tpu_custom_call.1} parent=35 // pred_fallthru
          _
      $region36: #{tpu_custom_call.1} parent=5 // pred_fallthru
        _
      %p1798 = scmp.le.s32.totalorder 2, %s13
      // Predicated region
      $region41: #{tpu_custom_call.1} parent=5 // pred_check
        %p1799 = pneg %p1798
      $region42: #{tpu_custom_call.1} parent=5 // pred_check_branch
        %1801 = sbr.rel (%p1799) target = $region44
      $region43: #{tpu_custom_call.1} parent=5 // pred_region
        %s1802 = ssub.s32 %s13, 2
        // Predicated region
        $region45: #{tpu_custom_call.1} parent=43 // pred_check
          %p1803 = pneg %p161
        $region46: #{tpu_custom_call.1} parent=43 // pred_check_branch
          %1805 = sbr.rel (%p1803) target = $region48
        $region47: #{tpu_custom_call.1} parent=43 // pred_region
          %s1806 = sand.u32 %s146, 1
          %s1807 = scalar_lea.sflag [#allocation3], %s1806
          %s1808 = sand.u32 %s146, 1
          %s1809 = smul.addr %s1808, 96
          %s1810 = scalar_lea.vmem [#allocation2], %s1809
          %1811 = dma.done %s1807, 1536
        $region48: #{tpu_custom_call.1} parent=43 // pred_fallthru
          _
      $region44: #{tpu_custom_call.1} parent=5 // pred_fallthru
        _
    $region6: #{tpu_custom_call.1} parent=1 // loop_footer
      %s17 = sadd.s32 1, %s13
    $region7: #{tpu_custom_call.1} parent=1 // loop_footer_branch
      %12 = sbr.rel target = $region3
    $region8: #{tpu_custom_call.1} parent=1 // loop_exit
      _
    %1812 = vsyncpa [#allocation3], 1
    %s1813 = scalar_lea.sflag [#allocation3], 1
    %1814 = vsyncpa %s1813, 1

</llo_original>
